<compile_context>
chip_gen: v7x
topology: tpu7x:2x2x1
jax: 0.10.0
libtpu: 0.0.40
codegen_flags: <defaults>
</compile_context>

<pallas_src>
import functools
import numpy as np
import jax
import jax.numpy as jnp
from jax.experimental import pallas as pl
from jax.experimental.pallas import tpu as pltpu


def _round_up(x, m):
    return ((x + m - 1) // m) * m


def _fourier_kernel(coords_ref, b2_ref, bias2_ref, *rest, has_features):
    if has_features:
        feat_ref, out_ref = rest
    else:
        (out_ref,) = rest

    c = coords_ref[...]
    if c.dtype != jnp.float32:
        c = c.astype(jnp.float32)

    # K = num_input (3) contraction as unrolled VPU FMAs; bias folded into the
    # accumulator init.  2*pi / normalization already folded into b2 / bias2.
    b2 = b2_ref[...]                                  # (num_input, 2*half_dim)
    acc = bias2_ref[...] + c[:, 0:1] * b2[0, :]       # (tile_n, 2*half_dim)
    for k in range(1, b2.shape[0]):
        acc = acc + c[:, k:k + 1] * b2[k, :]

    # Second half of the columns carries an extra -pi/2 bias, so a single cos
    # produces [cos(freqs) | sin(freqs)] in one lane-coalesced EUP pass.
    trig = jnp.cos(acc)

    if has_features:
        f = feat_ref[...]
        if f.dtype != jnp.float32:
            f = f.astype(jnp.float32)
        # One store for the whole output tile (lane concat goes to the XLU slot).
        out_ref[...] = jnp.concatenate([trig, f], axis=-1).astype(out_ref.dtype)
    else:
        out_ref[...] = trig.astype(out_ref.dtype)


def _choose_tiling(N, tile_n):
    """Pick row tile + grid, generation-aware (v5e / v6e / v7x)."""
    kind = ""
    try:
        kind = jax.devices()[0].device_kind.lower()
    except Exception:
        pass
    is_v7 = "v7" in kind
    is_v5e = ("v5e" in kind) or ("v5 lite" in kind) or ("v5lite" in kind)

    if tile_n is None:
        # Lane-padded (minor dims 3/16/48 all pad to 128 lanes), double-buffered
        # coords + features + out blocks ~= tile_n * 3 KiB of VMEM.
        #   v6e: 32 MiB default scoped VMEM -> 8192 rows (~24 MiB)
        #   v5e: 16 MiB default scoped      -> 4096 rows (~12 MiB)
        #   v7x: 64 MiB physical / 32 MiB default, 2 TCs -> 4096 rows (headroom)
        tile_n = 4096 if (is_v5e or is_v7) else 8192

    n_up = _round_up(max(int(N), 1), 8)
    tile_n = max(8, min(_round_up(int(tile_n), 8), n_up))
    grid_n = pl.cdiv(N, tile_n)

    if is_v7 and N > 8:
        # Only v7x has 2 TensorCores per chip: keep the grid even (and >= 2)
        # so both cores get equal-sized steps.  v5e/v6e run the grid as a
        # sequential loop on one core, so small N stays a single resident step.
        grid_n = max(2, grid_n)
        grid_n += grid_n % 2
        tile_n = max(8, min(_round_up(pl.cdiv(N, grid_n), 8), n_up))
        grid_n = pl.cdiv(N, tile_n)

    return tile_n, grid_n


def fourier_embeddings(coords, gauss_B, features=None, *,
                       normalize=False,
                       spatial_size=(2753.0, 1056.0, 5966.0),
                       tile_n=None,
                       out_dtype=jnp.float32):
    """Pallas implementation of FourierEmbeddings.forward for 2-D coords (N, num_input)."""
    N, num_input = coords.shape
    assert gauss_B.shape[0] == num_input
    half_dim = gauss_B.shape[1]

    two_pi = jnp.float32(2.0 * np.pi)
    b = gauss_B.astype(jnp.float32)
    if normalize:
        # ((c - h)/h) * 2pi @ B  ==  c @ (diag(2pi/h) B)  -  2pi * sum_k B[k, :]
        half = jnp.asarray(spatial_size, jnp.float32)[:num_input] / 2.0
        b_eff = (two_pi / half)[:, None] * b
        bias = (-two_pi) * jnp.sum(b, axis=0, keepdims=True)          # (1, half_dim)
    else:
        b_eff = two_pi * b
        bias = jnp.zeros((1, half_dim), jnp.float32)

    # Doubled weights/bias so that cos(coords @ b2 + bias2) = [cos(freqs) | sin(freqs)]
    # (sin(x) = cos(x - pi/2)); gives one trig call and one coalesced store.
    b2 = jnp.concatenate([b_eff, b_eff], axis=1)                       # (num_input, 2*half)
    bias2 = jnp.concatenate([bias, bias - jnp.float32(np.pi / 2.0)], axis=1)

    has_features = features is not None
    F = features.shape[1] if has_features else 0
    out_dim = 2 * half_dim + F

    tile_n, grid_n = _choose_tiling(N, tile_n)

    kernel = functools.partial(_fourier_kernel, has_features=has_features)

    in_specs = [
        pl.BlockSpec((tile_n, num_input), lambda i: (i, 0)),
        # Grid-invariant blocks (constant index map): Mosaic does not re-DMA them
        # per step, so they stay resident across the whole grid.
        pl.BlockSpec((num_input, 2 * half_dim), lambda i: (0, 0)),
        pl.BlockSpec((1, 2 * half_dim), lambda i: (0, 0)),
    ]
    args = [coords, b2, bias2]
    if has_features:
        in_specs.append(pl.BlockSpec((tile_n, F), lambda i: (i, 0)))
        args.append(features)

    # Lane-padded, double-buffered VMEM estimate; 32 MiB is safe on all chips
    # (<= v7x default scoped limit, well under v5e/v6e 128 MiB physical).
    n_streams = 3 if has_features else 2
    vmem_est = tile_n * 128 * 4 * 2 * n_streams + (2 << 20)
    vmem_limit = int(min(max(vmem_est, 16 << 20), 32 << 20))

    out = pl.pallas_call(
        kernel,
        out_shape=jax.ShapeDtypeStruct((N, out_dim), out_dtype),
        grid_spec=pltpu.PrefetchScalarGridSpec(
            num_scalar_prefetch=0,
            grid=(grid_n,),
            in_specs=in_specs,
            # Ragged last block: Pallas clips the writeback to the first N rows.
            out_specs=pl.BlockSpec((tile_n, out_dim), lambda i: (i, 0)),
        ),
        compiler_params=pltpu.CompilerParams(
            dimension_semantics=("parallel",),
            vmem_limit_bytes=vmem_limit),
    )(*args)
    return out


def fourier_embeddings_ref(coords, gauss_B, features=None, *,
                           normalize=False,
                           spatial_size=(2753.0, 1056.0, 5966.0)):
    """Pure-JAX reference mirroring the PyTorch forward (un-folded math)."""
    c = coords.astype(jnp.float32)
    if normalize:
        half = jnp.asarray(spatial_size, jnp.float32)[:coords.shape[1]] / 2.0
        c = (c - half) / half
    c = c * (2.0 * np.pi)
    freqs = c @ gauss_B.astype(jnp.float32)
    parts = [jnp.cos(freqs), jnp.sin(freqs)]
    if features is not None:
        parts.append(features.astype(jnp.float32))
    return jnp.concatenate(parts, axis=-1)


if __name__ == "__main__":
    # Module config (defaults): D=3, num_input_features=3, positional_encoding_dim=32,
    # gauss_scale=1.0, spatial_size=[2753, 1056, 5966].
    num_input = 3
    pos_dim = 32          # gauss_B is (num_input, pos_dim // 2)
    gauss_scale = 1.0
    N = 200
    F = 16                # extra feature channels concatenated at the end
    spatial_size = (2753.0, 1056.0, 5966.0)

    key = jax.random.PRNGKey(0)
    k_b, k_c, k_f = jax.random.split(key, 3)

    gauss_B = jax.random.normal(k_b, (num_input, pos_dim // 2), dtype=jnp.float32) * gauss_scale
    coords = jax.random.uniform(k_c, (N, num_input), dtype=jnp.float32) * 16.0
    features = jax.random.normal(k_f, (N, F), dtype=jnp.float32)

    # 1) normalize=False, with features.
    out = jax.block_until_ready(fourier_embeddings(coords, gauss_B, features, normalize=False))
    ref = fourier_embeddings_ref(coords, gauss_B, features, normalize=False)
    assert out.shape == (N, pos_dim + F), out.shape
    assert out.dtype == jnp.float32
    np.testing.assert_allclose(np.asarray(out), np.asarray(ref), rtol=1e-3, atol=1e-3)

    # 2) features=None branch.
    out2 = jax.block_until_ready(fourier_embeddings(coords, gauss_B, None, normalize=False))
    ref2 = fourier_embeddings_ref(coords, gauss_B, None, normalize=False)
    assert out2.shape == (N, pos_dim)
    np.testing.assert_allclose(np.asarray(out2), np.asarray(ref2), rtol=1e-3, atol=1e-3)

    # 3) normalize=True branch (coords in detector units).
    coords_big = jax.random.uniform(k_c, (N, num_input), dtype=jnp.float32) \
        * jnp.asarray(spatial_size, jnp.float32)
    out3 = jax.block_until_ready(
        fourier_embeddings(coords_big, gauss_B, features,
                           normalize=True, spatial_size=spatial_size))
    ref3 = fourier_embeddings_ref(coords_big, gauss_B, features,
                                  normalize=True, spatial_size=spatial_size)
    np.testing.assert_allclose(np.asarray(out3), np.asarray(ref3), rtol=1e-3, atol=1e-3)

    # 4) Forced small tile -> multi-step ragged grid (200 rows, 64-row tiles),
    #    exercising the no-pad / clipped-last-block path.
    out4 = jax.block_until_ready(
        fourier_embeddings(coords, gauss_B, features, normalize=False, tile_n=64))
    np.testing.assert_allclose(np.asarray(out4), np.asarray(ref), rtol=1e-3, atol=1e-3)

    print("KERNEL_OK")
</pallas_src>

<mosaic_0001>
module attributes {stable_mosaic.version = 11 : i64} {
  func.func @_fourier_kernel(%arg0: i32, %arg1: memref<200x3xf32, #tpu.memory_space<vmem>>, %arg2: memref<3x32xf32, #tpu.memory_space<vmem>>, %arg3: memref<1x32xf32, #tpu.memory_space<vmem>>, %arg4: memref<200x16xf32, #tpu.memory_space<vmem>>, %arg5: memref<200x48xf32, #tpu.memory_space<vmem>>) attributes {dimension_semantics = [#tpu.dimension_semantics<parallel>], iteration_bounds = array<i64: 1>, scalar_prefetch = 0 : i64, scratch_operands = 0 : i64, tpu.core_type = #tpu.core_type<tc>, window_params = [{transform_indices = @transform_0, window_bounds = array<i64: 200, 3>}, {pipeline_mode = #tpu.pipeline_mode<synchronous>, transform_indices = @transform_1, window_bounds = array<i64: 3, 32>}, {pipeline_mode = #tpu.pipeline_mode<synchronous>, transform_indices = @transform_2, window_bounds = array<i64: 1, 32>}, {transform_indices = @transform_3, window_bounds = array<i64: 200, 16>}, {transform_indices = @transform_4, window_bounds = array<i64: 200, 48>}]} {
    %c0 = arith.constant 0 : index
    %c0_0 = arith.constant 0 : index
    %0 = vector.load %arg1[%c0, %c0_0] : memref<200x3xf32, #tpu.memory_space<vmem>>, vector<200x3xf32>
    %c0_1 = arith.constant 0 : index
    %c0_2 = arith.constant 0 : index
    %1 = vector.load %arg2[%c0_1, %c0_2] : memref<3x32xf32, #tpu.memory_space<vmem>>, vector<3x32xf32>
    %c0_3 = arith.constant 0 : index
    %c0_4 = arith.constant 0 : index
    %2 = vector.load %arg3[%c0_3, %c0_4] : memref<1x32xf32, #tpu.memory_space<vmem>>, vector<1x32xf32>
    %3 = vector.extract_strided_slice %0 {offsets = [0, 0], sizes = [200, 1], strides = [1, 1]} : vector<200x3xf32> to vector<200x1xf32>
    %4 = vector.extract_strided_slice %1 {offsets = [0, 0], sizes = [1, 32], strides = [1, 1]} : vector<3x32xf32> to vector<1x32xf32>
    %5 = vector.shape_cast %4 : vector<1x32xf32> to vector<32xf32>
    %6 = vector.shape_cast %5 : vector<32xf32> to vector<1x32xf32>
    %7 = vector.broadcast %3 : vector<200x1xf32> to vector<200x32xf32>
    %8 = vector.broadcast %6 : vector<1x32xf32> to vector<200x32xf32>
    %9 = arith.mulf %7, %8 : vector<200x32xf32>
    %10 = vector.broadcast %2 : vector<1x32xf32> to vector<200x32xf32>
    %11 = arith.addf %10, %9 : vector<200x32xf32>
    %12 = vector.extract_strided_slice %0 {offsets = [0, 1], sizes = [200, 1], strides = [1, 1]} : vector<200x3xf32> to vector<200x1xf32>
    %13 = vector.extract_strided_slice %1 {offsets = [1, 0], sizes = [1, 32], strides = [1, 1]} : vector<3x32xf32> to vector<1x32xf32>
    %14 = vector.shape_cast %13 : vector<1x32xf32> to vector<32xf32>
    %15 = vector.shape_cast %14 : vector<32xf32> to vector<1x32xf32>
    %16 = vector.broadcast %12 : vector<200x1xf32> to vector<200x32xf32>
    %17 = vector.broadcast %15 : vector<1x32xf32> to vector<200x32xf32>
    %18 = arith.mulf %16, %17 : vector<200x32xf32>
    %19 = arith.addf %11, %18 : vector<200x32xf32>
    %20 = vector.extract_strided_slice %0 {offsets = [0, 2], sizes = [200, 1], strides = [1, 1]} : vector<200x3xf32> to vector<200x1xf32>
    %21 = vector.extract_strided_slice %1 {offsets = [2, 0], sizes = [1, 32], strides = [1, 1]} : vector<3x32xf32> to vector<1x32xf32>
    %22 = vector.shape_cast %21 : vector<1x32xf32> to vector<32xf32>
    %23 = vector.shape_cast %22 : vector<32xf32> to vector<1x32xf32>
    %24 = vector.broadcast %20 : vector<200x1xf32> to vector<200x32xf32>
    %25 = vector.broadcast %23 : vector<1x32xf32> to vector<200x32xf32>
    %26 = arith.mulf %24, %25 : vector<200x32xf32>
    %27 = arith.addf %19, %26 : vector<200x32xf32>
    %28 = math.cos %27 : vector<200x32xf32>
    %c0_5 = arith.constant 0 : index
    %c0_6 = arith.constant 0 : index
    %29 = vector.load %arg4[%c0_5, %c0_6] : memref<200x16xf32, #tpu.memory_space<vmem>>, vector<200x16xf32>
    %30 = tpu.concatenate %28, %29 in 1 : vector<200x32xf32>, vector<200x16xf32> -> vector<200x48xf32>
    %c0_7 = arith.constant 0 : index
    %c0_8 = arith.constant 0 : index
    %31 = vector.load %arg5[%c0_7, %c0_8] : memref<200x48xf32, #tpu.memory_space<vmem>>, vector<200x48xf32>
    tpu.vector_store %arg5[%c0_7, %c0_8], %30 {strides = array<i32>} : memref<200x48xf32, #tpu.memory_space<vmem>>, vector<200x48xf32>,
    return
  }
  func.func @transform_0(%arg0: i32) -> (i32, i32) {
    %c0_i32 = arith.constant 0 : i32
    %c0_i32_0 = arith.constant 0 : i32
    return %arg0, %c0_i32 : i32, i32
  }
  func.func @transform_1(%arg0: i32) -> (i32, i32) {
    %c0_i32 = arith.constant 0 : i32
    %c0_i32_0 = arith.constant 0 : i32
    %c0_i32_1 = arith.constant 0 : i32
    return %c0_i32, %c0_i32_0 : i32, i32
  }
  func.func @transform_2(%arg0: i32) -> (i32, i32) {
    %c0_i32 = arith.constant 0 : i32
    %c0_i32_0 = arith.constant 0 : i32
    %c0_i32_1 = arith.constant 0 : i32
    return %c0_i32, %c0_i32_0 : i32, i32
  }
  func.func @transform_3(%arg0: i32) -> (i32, i32) {
    %c0_i32 = arith.constant 0 : i32
    %c0_i32_0 = arith.constant 0 : i32
    return %arg0, %c0_i32 : i32, i32
  }
  func.func @transform_4(%arg0: i32) -> (i32, i32) {
    %c0_i32 = arith.constant 0 : i32
    %c0_i32_0 = arith.constant 0 : i32
    return %arg0, %c0_i32 : i32, i32
  }
}

</mosaic_0001>

<llo_original>
// kernel: tpu_custom_call.1
$region0: #{tpu_custom_call.1}
  #allocation0 [shape = 'u32[]', space=smem, size = 0x4, offset = 0x4, fixed_abs, tag = 'smem constant byte address 0x4 - core index']
  #allocation1 [shape = 'u32[144,128]{1,0:T(1,128)}', space=vmem, size = 0x12000, scoped, tag = 'internal scratch']
  %s0 = inlined_call_operand.vmem [shape: f32[200,3], index: 0, kind: input, shape index: {}]
  %s1 = inlined_call_operand.vmem [shape: f32[3,32], index: 1, kind: input, shape index: {}]
  %s2 = inlined_call_operand.vmem [shape: f32[1,32], index: 2, kind: input, shape index: {}]
  %s3 = inlined_call_operand.vmem [shape: f32[200,16], index: 3, kind: input, shape index: {}]
  %s4 = inlined_call_operand.vmem [shape: f32[200,48], index: 4, kind: output, shape index: {}]
  %s5 = sld [smem:[#allocation0]]
  $region26: #{tpu_custom_call.1} parent=0
    _
  %s7 = ssub.s32 1, %s5
  %s8 = scalar_select 0, %s7, %s5
  // Predicated region
  $region2: #{tpu_custom_call.1} parent=0 // pred_check
    _
  $region3: #{tpu_custom_call.1} parent=0 // pred_check_branch
    %10 = sbr.rel (0) target = $region5
  $region4: #{tpu_custom_call.1} parent=0 // pred_region
    _
  $region5: #{tpu_custom_call.1} parent=0 // pred_fallthru
    _
  // Predicated region
  $region6: #{tpu_custom_call.1} parent=0 // pred_check
    _
  $region7: #{tpu_custom_call.1} parent=0 // pred_check_branch
    %12 = sbr.rel (0) target = $region9
  $region8: #{tpu_custom_call.1} parent=0 // pred_region
    _
  $region9: #{tpu_custom_call.1} parent=0 // pred_fallthru
    _
  // Predicated region
  $region10: #{tpu_custom_call.1} parent=0 // pred_check
    _
  $region11: #{tpu_custom_call.1} parent=0 // pred_check_branch
    %14 = sbr.rel (0) target = $region13
  $region12: #{tpu_custom_call.1} parent=0 // pred_region
    _
  $region13: #{tpu_custom_call.1} parent=0 // pred_fallthru
    _
  // Predicated region
  $region14: #{tpu_custom_call.1} parent=0 // pred_check
    _
  $region15: #{tpu_custom_call.1} parent=0 // pred_check_branch
    %16 = sbr.rel (0) target = $region17
  $region16: #{tpu_custom_call.1} parent=0 // pred_region
    _
  $region17: #{tpu_custom_call.1} parent=0 // pred_fallthru
    _
  %v17 = vld [vmem:[%s0] sm:$0xff]
  %v18 = vld [vmem:[%s0 + $0x8] sm:$0xff]
  %v19 = vld [vmem:[%s0 + $0x10] sm:$0xff]
  %v20 = vld [vmem:[%s0 + $0x18] sm:$0xff]
  %v21 = vld [vmem:[%s0 + $0x20] sm:$0xff]
  %v22 = vld [vmem:[%s0 + $0x28] sm:$0xff]
  %v23 = vld [vmem:[%s0 + $0x30] sm:$0xff]
  %v24 = vld [vmem:[%s0 + $0x38] sm:$0xff]
  %v25 = vld [vmem:[%s0 + $0x40] sm:$0xff]
  %v26 = vld [vmem:[%s0 + $0x48] sm:$0xff]
  %v27 = vld [vmem:[%s0 + $0x50] sm:$0xff]
  %v28 = vld [vmem:[%s0 + $0x58] sm:$0xff]
  %v29 = vld [vmem:[%s0 + $0x60] sm:$0xff]
  %v30 = vld [vmem:[%s0 + $0x68] sm:$0xff]
  %v31 = vld [vmem:[%s0 + $0x70] sm:$0xff]
  %v32 = vld [vmem:[%s0 + $0x78] sm:$0xff]
  %v33 = vld [vmem:[%s0 + $0x80] sm:$0xff]
  %v34 = vld [vmem:[%s0 + $0x88] sm:$0xff]
  %v35 = vld [vmem:[%s0 + $0x90] sm:$0xff]
  %v36 = vld [vmem:[%s0 + $0x98] sm:$0xff]
  %v37 = vld [vmem:[%s0 + $0xa0] sm:$0xff]
  %v38 = vld [vmem:[%s0 + $0xa8] sm:$0xff]
  %v39 = vld [vmem:[%s0 + $0xb0] sm:$0xff]
  %v40 = vld [vmem:[%s0 + $0xb8] sm:$0xff]
  %v41 = vld [vmem:[%s0 + $0xc0] sm:$0xff]
  %v42 = vld [vmem:[%s1] sm:$0x7]
  %v43 = vld [vmem:[%s2] sm:$0x1]
  %45 = vset.pattern.permute.xlu0 0
  %46 = vperm.xlu0 %45, %v17
  %v47 = vpop.permute.xlu0 %46
  %50 = vset.pattern.permute.xlu0 0
  %51 = vperm.xlu0 %50, %v18
  %v52 = vpop.permute.xlu0 %51
  %55 = vset.pattern.permute.xlu0 0
  %56 = vperm.xlu0 %55, %v19
  %v57 = vpop.permute.xlu0 %56
  %60 = vset.pattern.permute.xlu0 0
  %61 = vperm.xlu0 %60, %v20
  %v62 = vpop.permute.xlu0 %61
  %65 = vset.pattern.permute.xlu0 0
  %66 = vperm.xlu0 %65, %v21
  %v67 = vpop.permute.xlu0 %66
  %70 = vset.pattern.permute.xlu0 0
  %71 = vperm.xlu0 %70, %v22
  %v72 = vpop.permute.xlu0 %71
  %75 = vset.pattern.permute.xlu0 0
  %76 = vperm.xlu0 %75, %v23
  %v77 = vpop.permute.xlu0 %76
  %80 = vset.pattern.permute.xlu0 0
  %81 = vperm.xlu0 %80, %v24
  %v82 = vpop.permute.xlu0 %81
  %85 = vset.pattern.permute.xlu0 0
  %86 = vperm.xlu0 %85, %v25
  %v87 = vpop.permute.xlu0 %86
  %90 = vset.pattern.permute.xlu0 0
  %91 = vperm.xlu0 %90, %v26
  %v92 = vpop.permute.xlu0 %91
  %95 = vset.pattern.permute.xlu0 0
  %96 = vperm.xlu0 %95, %v27
  %v97 = vpop.permute.xlu0 %96
  %100 = vset.pattern.permute.xlu0 0
  %101 = vperm.xlu0 %100, %v28
  %v102 = vpop.permute.xlu0 %101
  %105 = vset.pattern.permute.xlu0 0
  %106 = vperm.xlu0 %105, %v29
  %v107 = vpop.permute.xlu0 %106
  %110 = vset.pattern.permute.xlu0 0
  %111 = vperm.xlu0 %110, %v30
  %v112 = vpop.permute.xlu0 %111
  %115 = vset.pattern.permute.xlu0 0
  %116 = vperm.xlu0 %115, %v31
  %v117 = vpop.permute.xlu0 %116
  %120 = vset.pattern.permute.xlu0 0
  %121 = vperm.xlu0 %120, %v32
  %v122 = vpop.permute.xlu0 %121
  %125 = vset.pattern.permute.xlu0 0
  %126 = vperm.xlu0 %125, %v33
  %v127 = vpop.permute.xlu0 %126
  %130 = vset.pattern.permute.xlu0 0
  %131 = vperm.xlu0 %130, %v34
  %v132 = vpop.permute.xlu0 %131
  %135 = vset.pattern.permute.xlu0 0
  %136 = vperm.xlu0 %135, %v35
  %v137 = vpop.permute.xlu0 %136
  %140 = vset.pattern.permute.xlu0 0
  %141 = vperm.xlu0 %140, %v36
  %v142 = vpop.permute.xlu0 %141
  %145 = vset.pattern.permute.xlu0 0
  %146 = vperm.xlu0 %145, %v37
  %v147 = vpop.permute.xlu0 %146
  %150 = vset.pattern.permute.xlu0 0
  %151 = vperm.xlu0 %150, %v38
  %v152 = vpop.permute.xlu0 %151
  %155 = vset.pattern.permute.xlu0 0
  %156 = vperm.xlu0 %155, %v39
  %v157 = vpop.permute.xlu0 %156
  %160 = vset.pattern.permute.xlu0 0
  %161 = vperm.xlu0 %160, %v40
  %v162 = vpop.permute.xlu0 %161
  %165 = vset.pattern.permute.xlu0 0
  %166 = vperm.xlu0 %165, %v41
  %v167 = vpop.permute.xlu0 %166
  %v169 = vlaneseq
  %v170 = vshrl.u32 %v169, 7
  %v171 = vsub.s32 0, %v170
  %v172 = vrot.slane %v42, %v171
  %v173 = vmul.f32 %v47, %v172
  %v174 = vmul.f32 %v52, %v172
  %v175 = vmul.f32 %v57, %v172
  %v176 = vmul.f32 %v62, %v172
  %v177 = vmul.f32 %v67, %v172
  %v178 = vmul.f32 %v72, %v172
  %v179 = vmul.f32 %v77, %v172
  %v180 = vmul.f32 %v82, %v172
  %v181 = vmul.f32 %v87, %v172
  %v182 = vmul.f32 %v92, %v172
  %v183 = vmul.f32 %v97, %v172
  %v184 = vmul.f32 %v102, %v172
  %v185 = vmul.f32 %v107, %v172
  %v186 = vmul.f32 %v112, %v172
  %v187 = vmul.f32 %v117, %v172
  %v188 = vmul.f32 %v122, %v172
  %v189 = vmul.f32 %v127, %v172
  %v190 = vmul.f32 %v132, %v172
  %v191 = vmul.f32 %v137, %v172
  %v192 = vmul.f32 %v142, %v172
  %v193 = vmul.f32 %v147, %v172
  %v194 = vmul.f32 %v152, %v172
  %v195 = vmul.f32 %v157, %v172
  %v196 = vmul.f32 %v162, %v172
  %v197 = vmul.f32 %v167, %v172
  %v199 = vlaneseq
  %v200 = vshrl.u32 %v199, 7
  %v201 = vsub.s32 0, %v200
  %v202 = vrot.slane %v43, %v201
  %v204 = vadd.f32 %v202, %v173
  %v205 = vadd.f32 %v202, %v174
  %v206 = vadd.f32 %v202, %v175
  %v207 = vadd.f32 %v202, %v176
  %v208 = vadd.f32 %v202, %v177
  %v209 = vadd.f32 %v202, %v178
  %v210 = vadd.f32 %v202, %v179
  %v211 = vadd.f32 %v202, %v180
  %v212 = vadd.f32 %v202, %v181
  %v213 = vadd.f32 %v202, %v182
  %v214 = vadd.f32 %v202, %v183
  %v215 = vadd.f32 %v202, %v184
  %v216 = vadd.f32 %v202, %v185
  %v217 = vadd.f32 %v202, %v186
  %v218 = vadd.f32 %v202, %v187
  %v219 = vadd.f32 %v202, %v188
  %v220 = vadd.f32 %v202, %v189
  %v221 = vadd.f32 %v202, %v190
  %v222 = vadd.f32 %v202, %v191
  %v223 = vadd.f32 %v202, %v192
  %v224 = vadd.f32 %v202, %v193
  %v225 = vadd.f32 %v202, %v194
  %v226 = vadd.f32 %v202, %v195
  %v227 = vadd.f32 %v202, %v196
  %v228 = vadd.f32 %v202, %v197
  %229 = vset.pattern.permute.xlu0 1
  %230 = vperm.xlu0 %229, %v17
  %v231 = vpop.permute.xlu0 %230
  %233 = vset.pattern.permute.xlu0 1
  %234 = vperm.xlu0 %233, %v18
  %v235 = vpop.permute.xlu0 %234
  %237 = vset.pattern.permute.xlu0 1
  %238 = vperm.xlu0 %237, %v19
  %v239 = vpop.permute.xlu0 %238
  %241 = vset.pattern.permute.xlu0 1
  %242 = vperm.xlu0 %241, %v20
  %v243 = vpop.permute.xlu0 %242
  %245 = vset.pattern.permute.xlu0 1
  %246 = vperm.xlu0 %245, %v21
  %v247 = vpop.permute.xlu0 %246
  %249 = vset.pattern.permute.xlu0 1
  %250 = vperm.xlu0 %249, %v22
  %v251 = vpop.permute.xlu0 %250
  %253 = vset.pattern.permute.xlu0 1
  %254 = vperm.xlu0 %253, %v23
  %v255 = vpop.permute.xlu0 %254
  %257 = vset.pattern.permute.xlu0 1
  %258 = vperm.xlu0 %257, %v24
  %v259 = vpop.permute.xlu0 %258
  %261 = vset.pattern.permute.xlu0 1
  %262 = vperm.xlu0 %261, %v25
  %v263 = vpop.permute.xlu0 %262
  %265 = vset.pattern.permute.xlu0 1
  %266 = vperm.xlu0 %265, %v26
  %v267 = vpop.permute.xlu0 %266
  %269 = vset.pattern.permute.xlu0 1
  %270 = vperm.xlu0 %269, %v27
  %v271 = vpop.permute.xlu0 %270
  %273 = vset.pattern.permute.xlu0 1
  %274 = vperm.xlu0 %273, %v28
  %v275 = vpop.permute.xlu0 %274
  %277 = vset.pattern.permute.xlu0 1
  %278 = vperm.xlu0 %277, %v29
  %v279 = vpop.permute.xlu0 %278
  %281 = vset.pattern.permute.xlu0 1
  %282 = vperm.xlu0 %281, %v30
  %v283 = vpop.permute.xlu0 %282
  %285 = vset.pattern.permute.xlu0 1
  %286 = vperm.xlu0 %285, %v31
  %v287 = vpop.permute.xlu0 %286
  %289 = vset.pattern.permute.xlu0 1
  %290 = vperm.xlu0 %289, %v32
  %v291 = vpop.permute.xlu0 %290
  %293 = vset.pattern.permute.xlu0 1
  %294 = vperm.xlu0 %293, %v33
  %v295 = vpop.permute.xlu0 %294
  %297 = vset.pattern.permute.xlu0 1
  %298 = vperm.xlu0 %297, %v34
  %v299 = vpop.permute.xlu0 %298
  %301 = vset.pattern.permute.xlu0 1
  %302 = vperm.xlu0 %301, %v35
  %v303 = vpop.permute.xlu0 %302
  %305 = vset.pattern.permute.xlu0 1
  %306 = vperm.xlu0 %305, %v36
  %v307 = vpop.permute.xlu0 %306
  %309 = vset.pattern.permute.xlu0 1
  %310 = vperm.xlu0 %309, %v37
  %v311 = vpop.permute.xlu0 %310
  %313 = vset.pattern.permute.xlu0 1
  %314 = vperm.xlu0 %313, %v38
  %v315 = vpop.permute.xlu0 %314
  %317 = vset.pattern.permute.xlu0 1
  %318 = vperm.xlu0 %317, %v39
  %v319 = vpop.permute.xlu0 %318
  %321 = vset.pattern.permute.xlu0 1
  %322 = vperm.xlu0 %321, %v40
  %v323 = vpop.permute.xlu0 %322
  %325 = vset.pattern.permute.xlu0 1
  %326 = vperm.xlu0 %325, %v41
  %v327 = vpop.permute.xlu0 %326
  %v329 = vlaneseq
  %v330 = vshrl.u32 %v329, 7
  %v331 = vsub.s32 1, %v330
  %v332 = vrot.slane %v42, %v331
  %v333 = vmul.f32 %v231, %v332
  %v334 = vmul.f32 %v235, %v332
  %v335 = vmul.f32 %v239, %v332
  %v336 = vmul.f32 %v243, %v332
  %v337 = vmul.f32 %v247, %v332
  %v338 = vmul.f32 %v251, %v332
  %v339 = vmul.f32 %v255, %v332
  %v340 = vmul.f32 %v259, %v332
  %v341 = vmul.f32 %v263, %v332
  %v342 = vmul.f32 %v267, %v332
  %v343 = vmul.f32 %v271, %v332
  %v344 = vmul.f32 %v275, %v332
  %v345 = vmul.f32 %v279, %v332
  %v346 = vmul.f32 %v283, %v332
  %v347 = vmul.f32 %v287, %v332
  %v348 = vmul.f32 %v291, %v332
  %v349 = vmul.f32 %v295, %v332
  %v350 = vmul.f32 %v299, %v332
  %v351 = vmul.f32 %v303, %v332
  %v352 = vmul.f32 %v307, %v332
  %v353 = vmul.f32 %v311, %v332
  %v354 = vmul.f32 %v315, %v332
  %v355 = vmul.f32 %v319, %v332
  %v356 = vmul.f32 %v323, %v332
  %v357 = vmul.f32 %v327, %v332
  %v358 = vadd.f32 %v204, %v333
  %v359 = vadd.f32 %v205, %v334
  %v360 = vadd.f32 %v206, %v335
  %v361 = vadd.f32 %v207, %v336
  %v362 = vadd.f32 %v208, %v337
  %v363 = vadd.f32 %v209, %v338
  %v364 = vadd.f32 %v210, %v339
  %v365 = vadd.f32 %v211, %v340
  %v366 = vadd.f32 %v212, %v341
  %v367 = vadd.f32 %v213, %v342
  %v368 = vadd.f32 %v214, %v343
  %v369 = vadd.f32 %v215, %v344
  %v370 = vadd.f32 %v216, %v345
  %v371 = vadd.f32 %v217, %v346
  %v372 = vadd.f32 %v218, %v347
  %v373 = vadd.f32 %v219, %v348
  %v374 = vadd.f32 %v220, %v349
  %v375 = vadd.f32 %v221, %v350
  %v376 = vadd.f32 %v222, %v351
  %v377 = vadd.f32 %v223, %v352
  %v378 = vadd.f32 %v224, %v353
  %v379 = vadd.f32 %v225, %v354
  %v380 = vadd.f32 %v226, %v355
  %v381 = vadd.f32 %v227, %v356
  %v382 = vadd.f32 %v228, %v357
  %383 = vset.pattern.permute.xlu0 2
  %384 = vperm.xlu0 %383, %v17
  %v385 = vpop.permute.xlu0 %384
  %387 = vset.pattern.permute.xlu0 2
  %388 = vperm.xlu0 %387, %v18
  %v389 = vpop.permute.xlu0 %388
  %391 = vset.pattern.permute.xlu0 2
  %392 = vperm.xlu0 %391, %v19
  %v393 = vpop.permute.xlu0 %392
  %395 = vset.pattern.permute.xlu0 2
  %396 = vperm.xlu0 %395, %v20
  %v397 = vpop.permute.xlu0 %396
  %399 = vset.pattern.permute.xlu0 2
  %400 = vperm.xlu0 %399, %v21
  %v401 = vpop.permute.xlu0 %400
  %403 = vset.pattern.permute.xlu0 2
  %404 = vperm.xlu0 %403, %v22
  %v405 = vpop.permute.xlu0 %404
  %407 = vset.pattern.permute.xlu0 2
  %408 = vperm.xlu0 %407, %v23
  %v409 = vpop.permute.xlu0 %408
  %411 = vset.pattern.permute.xlu0 2
  %412 = vperm.xlu0 %411, %v24
  %v413 = vpop.permute.xlu0 %412
  %415 = vset.pattern.permute.xlu0 2
  %416 = vperm.xlu0 %415, %v25
  %v417 = vpop.permute.xlu0 %416
  %419 = vset.pattern.permute.xlu0 2
  %420 = vperm.xlu0 %419, %v26
  %v421 = vpop.permute.xlu0 %420
  %423 = vset.pattern.permute.xlu0 2
  %424 = vperm.xlu0 %423, %v27
  %v425 = vpop.permute.xlu0 %424
  %427 = vset.pattern.permute.xlu0 2
  %428 = vperm.xlu0 %427, %v28
  %v429 = vpop.permute.xlu0 %428
  %431 = vset.pattern.permute.xlu0 2
  %432 = vperm.xlu0 %431, %v29
  %v433 = vpop.permute.xlu0 %432
  %435 = vset.pattern.permute.xlu0 2
  %436 = vperm.xlu0 %435, %v30
  %v437 = vpop.permute.xlu0 %436
  %439 = vset.pattern.permute.xlu0 2
  %440 = vperm.xlu0 %439, %v31
  %v441 = vpop.permute.xlu0 %440
  %443 = vset.pattern.permute.xlu0 2
  %444 = vperm.xlu0 %443, %v32
  %v445 = vpop.permute.xlu0 %444
  %447 = vset.pattern.permute.xlu0 2
  %448 = vperm.xlu0 %447, %v33
  %v449 = vpop.permute.xlu0 %448
  %451 = vset.pattern.permute.xlu0 2
  %452 = vperm.xlu0 %451, %v34
  %v453 = vpop.permute.xlu0 %452
  %455 = vset.pattern.permute.xlu0 2
  %456 = vperm.xlu0 %455, %v35
  %v457 = vpop.permute.xlu0 %456
  %459 = vset.pattern.permute.xlu0 2
  %460 = vperm.xlu0 %459, %v36
  %v461 = vpop.permute.xlu0 %460
  %463 = vset.pattern.permute.xlu0 2
  %464 = vperm.xlu0 %463, %v37
  %v465 = vpop.permute.xlu0 %464
  %467 = vset.pattern.permute.xlu0 2
  %468 = vperm.xlu0 %467, %v38
  %v469 = vpop.permute.xlu0 %468
  %471 = vset.pattern.permute.xlu0 2
  %472 = vperm.xlu0 %471, %v39
  %v473 = vpop.permute.xlu0 %472
  %475 = vset.pattern.permute.xlu0 2
  %476 = vperm.xlu0 %475, %v40
  %v477 = vpop.permute.xlu0 %476
  %479 = vset.pattern.permute.xlu0 2
  %480 = vperm.xlu0 %479, %v41
  %v481 = vpop.permute.xlu0 %480
  %v483 = vlaneseq
  %v484 = vshrl.u32 %v483, 7
  %v485 = vsub.s32 2, %v484
  %v486 = vrot.slane %v42, %v485
  %v487 = vmul.f32 %v385, %v486
  %v488 = vmul.f32 %v389, %v486
  %v489 = vmul.f32 %v393, %v486
  %v490 = vmul.f32 %v397, %v486
  %v491 = vmul.f32 %v401, %v486
  %v492 = vmul.f32 %v405, %v486
  %v493 = vmul.f32 %v409, %v486
  %v494 = vmul.f32 %v413, %v486
  %v495 = vmul.f32 %v417, %v486
  %v496 = vmul.f32 %v421, %v486
  %v497 = vmul.f32 %v425, %v486
  %v498 = vmul.f32 %v429, %v486
  %v499 = vmul.f32 %v433, %v486
  %v500 = vmul.f32 %v437, %v486
  %v501 = vmul.f32 %v441, %v486
  %v502 = vmul.f32 %v445, %v486
  %v503 = vmul.f32 %v449, %v486
  %v504 = vmul.f32 %v453, %v486
  %v505 = vmul.f32 %v457, %v486
  %v506 = vmul.f32 %v461, %v486
  %v507 = vmul.f32 %v465, %v486
  %v508 = vmul.f32 %v469, %v486
  %v509 = vmul.f32 %v473, %v486
  %v510 = vmul.f32 %v477, %v486
  %v511 = vmul.f32 %v481, %v486
  %v512 = vadd.f32 %v358, %v487
  %v513 = vadd.f32 %v359, %v488
  %v514 = vadd.f32 %v360, %v489
  %v515 = vadd.f32 %v361, %v490
  %v516 = vadd.f32 %v362, %v491
  %v517 = vadd.f32 %v363, %v492
  %v518 = vadd.f32 %v364, %v493
  %v519 = vadd.f32 %v365, %v494
  %v520 = vadd.f32 %v366, %v495
  %v521 = vadd.f32 %v367, %v496
  %v522 = vadd.f32 %v368, %v497
  %v523 = vadd.f32 %v369, %v498
  %v524 = vadd.f32 %v370, %v499
  %v525 = vadd.f32 %v371, %v500
  %v526 = vadd.f32 %v372, %v501
  %v527 = vadd.f32 %v373, %v502
  %v528 = vadd.f32 %v374, %v503
  %v529 = vadd.f32 %v375, %v504
  %v530 = vadd.f32 %v376, %v505
  %v531 = vadd.f32 %v377, %v506
  %v532 = vadd.f32 %v378, %v507
  %v533 = vadd.f32 %v379, %v508
  %v534 = vadd.f32 %v380, %v509
  %v535 = vadd.f32 %v381, %v510
  %v536 = vadd.f32 %v382, %v511
  %v537 = vand.u32 2147483647, %v512
  %vm538 = vcmp.le.f32.partialorder %v537, 0.7853982
  %vm539 = vcmp.lt.s32.totalorder %v512, 0
  %v540 = vand.u32 %v512, 2139095040
  %v541 = vshrl.u32 %v540, 23
  %v542 = vsub.s32 %v541, 127
  %v543 = vand.u32 2147483647, %v512
  %v544 = vand.u32 %v543, 8388607
  %v545 = vor.u32 %v544, 8388608
  %v546 = vsub.s32 0, %v545
  %v547 = vadd.s32 %v542, 1
  %vm548 = vcmp.gt.s32.totalorder %v547, 0
  %v549 = vsel %vm548, %v547, 0
  %v550 = vshrl.u32 %v549, 5
  %v551 = vand.u32 %v549, 31
  %v552 = vsub.s32 32, %v551
  %v553 = vshrl.u32 683565275, %v552
  %v554 = vshll.u32 683565275, %v551
  %v555 = vshrl.u32 2475754826, %v552
  %v556 = vor.u32 %v554, %v555
  %v557 = vshll.u32 2475754826, %v551
  %v558 = vshrl.u32 2131351028, %v552
  %v559 = vor.u32 %v557, %v558
  %v560 = vshll.u32 2131351028, %v551
  %v561 = vshrl.u32 2102212464, %v552
  %v562 = vor.u32 %v560, %v561
  %v563 = vshll.u32 2102212464, %v551
  %v564 = vshrl.u32 920167782, %v552
  %v565 = vor.u32 %v563, %v564
  %v566 = vshll.u32 920167782, %v551
  %v567 = vshrl.u32 1326507024, %v552
  %v568 = vor.u32 %v566, %v567
  %vm569 = vcmp.lt.s32.totalorder %v550, 1
  %vm570 = vcmp.lt.s32.totalorder %v550, 2
  %vm571 = vcmp.lt.s32.totalorder %v550, 3
  %vm572 = vcmp.lt.s32.totalorder %v550, 4
  %v573 = vsel %vm569, %v553, %v556
  %v574 = vsel %vm572, %v562, 2102212464
  %v575 = vsel %vm571, %v559, %v574
  %v576 = vsel %vm570, %v573, %v575
  %v577 = vsel %vm569, %v556, %v559
  %v578 = vsel %vm572, %v565, 920167782
  %v579 = vsel %vm571, %v562, %v578
  %v580 = vsel %vm570, %v577, %v579
  %v581 = vsel %vm569, %v559, %v562
  %v582 = vsel %vm572, %v568, 1326507024
  %v583 = vsel %vm571, %v565, %v582
  %v584 = vsel %vm570, %v581, %v583
  %v585 = vshll.u32 %v545, 8
  %v586 = vmul.u32.u64.compose %v585, %v584
  %v587 = vextract.low.u32 %v586
  %v588 = vextract.high.u32 %v586
  %v589 = vmul.u32.u64.compose %v585, %v580
  %v590 = vextract.low.u32 %v589
  %v591 = vextract.high.u32 %v589
  %v592 = vmul.u32 %v585, %v576
  %v593 = vadd.s32 %v588, %v590
  %vm594 = vc.u32 %v588, %v590
  %v595 = vadd.s32 %v591, 1
  %v596 = vsel %vm594, %v595, %v591
  %v597 = vadd.s32 %v592, %v596
  %v598 = vadd.s32 %v597, 536870912
  %v599 = vshrl.u32 %v598, 30
  %v600 = vshll.u32 %v599, 30
  %v601 = vsub.s32 %v597, %v600
  %vm602 = vcmp.lt.s32.totalorder %v601, 0
  %v603 = vsub.s32 0, %v601
  %v604 = vsel %vm602, %v603, %v601
  %v605 = vclz %v604
  %v606 = vsub.s32 %v605, 2
  %vm607 = vcmp.gt.s32.totalorder 0, %v606
  %v608 = vsel %vm607, 0, %v606
  %v609 = vsub.s32 32, %v608
  %v610 = vshll.u32 %v601, %v608
  %v611 = vshrl.u32 %v593, %v609
  %v612 = vor.u32 %v610, %v611
  %v613 = vsub.s32 4294967266, %v608
  %v614 = vadd.s32 %v613, 127
  %v615 = vshll.u32 %v614, 23
  %v616 = vor.u32 4788187, %v615
  %v617 = vand.u32 2147483647, %v616
  %v619 = vcvt.s32.f32 %v612
  %v620 = vmul.f32 %v619, %v617
  %v621 = vxor.u32 %v620, 2147483648
  %v622 = vsel %vm539, %v621, %v620
  %v623 = vsub.s32 4, %v599
  %v624 = vsel %vm539, %v623, %v599
  %v625 = vsel %vm538, %v512, %v622
  %v626 = vsel %vm538, 0, %v624
  %v627 = vcosq.f32.pop %v625
  %v628 = vsinq.f32.pop %v625
  %vm629 = vweird.f32 %v512
  %v630 = vand.u32 %v626, 3
  %vm631 = vcmp.lt.s32.totalorder %v630, 2
  %vm632 = vcmp.eq.s32.totalorder %v630, 0
  %v633 = vxor.u32 %v628, 2147483648
  %v634 = vsel %vm632, %v627, %v633
  %vm635 = vcmp.eq.s32.totalorder %v630, 2
  %v636 = vxor.u32 %v627, 2147483648
  %v637 = vsel %vm635, %v636, %v628
  %v638 = vsel %vm631, %v634, %v637
  %v639 = vsel %vm629, nan, %v638
  %v640 = vand.u32 2147483647, %v513
  %vm641 = vcmp.le.f32.partialorder %v640, 0.7853982
  %vm642 = vcmp.lt.s32.totalorder %v513, 0
  %v643 = vand.u32 %v513, 2139095040
  %v644 = vshrl.u32 %v643, 23
  %v645 = vsub.s32 %v644, 127
  %v646 = vand.u32 2147483647, %v513
  %v647 = vand.u32 %v646, 8388607
  %v648 = vor.u32 %v647, 8388608
  %v649 = vsub.s32 0, %v648
  %v650 = vadd.s32 %v645, 1
  %vm651 = vcmp.gt.s32.totalorder %v650, 0
  %v652 = vsel %vm651, %v650, 0
  %v653 = vshrl.u32 %v652, 5
  %v654 = vand.u32 %v652, 31
  %v655 = vsub.s32 32, %v654
  %v656 = vshrl.u32 683565275, %v655
  %v657 = vshll.u32 683565275, %v654
  %v658 = vshrl.u32 2475754826, %v655
  %v659 = vor.u32 %v657, %v658
  %v660 = vshll.u32 2475754826, %v654
  %v661 = vshrl.u32 2131351028, %v655
  %v662 = vor.u32 %v660, %v661
  %v663 = vshll.u32 2131351028, %v654
  %v664 = vshrl.u32 2102212464, %v655
  %v665 = vor.u32 %v663, %v664
  %v666 = vshll.u32 2102212464, %v654
  %v667 = vshrl.u32 920167782, %v655
  %v668 = vor.u32 %v666, %v667
  %v669 = vshll.u32 920167782, %v654
  %v670 = vshrl.u32 1326507024, %v655
  %v671 = vor.u32 %v669, %v670
  %vm672 = vcmp.lt.s32.totalorder %v653, 1
  %vm673 = vcmp.lt.s32.totalorder %v653, 2
  %vm674 = vcmp.lt.s32.totalorder %v653, 3
  %vm675 = vcmp.lt.s32.totalorder %v653, 4
  %v676 = vsel %vm672, %v656, %v659
  %v677 = vsel %vm675, %v665, 2102212464
  %v678 = vsel %vm674, %v662, %v677
  %v679 = vsel %vm673, %v676, %v678
  %v680 = vsel %vm672, %v659, %v662
  %v681 = vsel %vm675, %v668, 920167782
  %v682 = vsel %vm674, %v665, %v681
  %v683 = vsel %vm673, %v680, %v682
  %v684 = vsel %vm672, %v662, %v665
  %v685 = vsel %vm675, %v671, 1326507024
  %v686 = vsel %vm674, %v668, %v685
  %v687 = vsel %vm673, %v684, %v686
  %v688 = vshll.u32 %v648, 8
  %v689 = vmul.u32.u64.compose %v688, %v687
  %v690 = vextract.low.u32 %v689
  %v691 = vextract.high.u32 %v689
  %v692 = vmul.u32.u64.compose %v688, %v683
  %v693 = vextract.low.u32 %v692
  %v694 = vextract.high.u32 %v692
  %v695 = vmul.u32 %v688, %v679
  %v696 = vadd.s32 %v691, %v693
  %vm697 = vc.u32 %v691, %v693
  %v698 = vadd.s32 %v694, 1
  %v699 = vsel %vm697, %v698, %v694
  %v700 = vadd.s32 %v695, %v699
  %v701 = vadd.s32 %v700, 536870912
  %v702 = vshrl.u32 %v701, 30
  %v703 = vshll.u32 %v702, 30
  %v704 = vsub.s32 %v700, %v703
  %vm705 = vcmp.lt.s32.totalorder %v704, 0
  %v706 = vsub.s32 0, %v704
  %v707 = vsel %vm705, %v706, %v704
  %v708 = vclz %v707
  %v709 = vsub.s32 %v708, 2
  %vm710 = vcmp.gt.s32.totalorder 0, %v709
  %v711 = vsel %vm710, 0, %v709
  %v712 = vsub.s32 32, %v711
  %v713 = vshll.u32 %v704, %v711
  %v714 = vshrl.u32 %v696, %v712
  %v715 = vor.u32 %v713, %v714
  %v716 = vsub.s32 4294967266, %v711
  %v717 = vadd.s32 %v716, 127
  %v718 = vshll.u32 %v717, 23
  %v719 = vor.u32 4788187, %v718
  %v720 = vand.u32 2147483647, %v719
  %v722 = vcvt.s32.f32 %v715
  %v723 = vmul.f32 %v722, %v720
  %v724 = vxor.u32 %v723, 2147483648
  %v725 = vsel %vm642, %v724, %v723
  %v726 = vsub.s32 4, %v702
  %v727 = vsel %vm642, %v726, %v702
  %v728 = vsel %vm641, %v513, %v725
  %v729 = vsel %vm641, 0, %v727
  %v730 = vcosq.f32.pop %v728
  %v731 = vsinq.f32.pop %v728
  %vm732 = vweird.f32 %v513
  %v733 = vand.u32 %v729, 3
  %vm734 = vcmp.lt.s32.totalorder %v733, 2
  %vm735 = vcmp.eq.s32.totalorder %v733, 0
  %v736 = vxor.u32 %v731, 2147483648
  %v737 = vsel %vm735, %v730, %v736
  %vm738 = vcmp.eq.s32.totalorder %v733, 2
  %v739 = vxor.u32 %v730, 2147483648
  %v740 = vsel %vm738, %v739, %v731
  %v741 = vsel %vm734, %v737, %v740
  %v742 = vsel %vm732, nan, %v741
  %v743 = vand.u32 2147483647, %v514
  %vm744 = vcmp.le.f32.partialorder %v743, 0.7853982
  %vm745 = vcmp.lt.s32.totalorder %v514, 0
  %v746 = vand.u32 %v514, 2139095040
  %v747 = vshrl.u32 %v746, 23
  %v748 = vsub.s32 %v747, 127
  %v749 = vand.u32 2147483647, %v514
  %v750 = vand.u32 %v749, 8388607
  %v751 = vor.u32 %v750, 8388608
  %v752 = vsub.s32 0, %v751
  %v753 = vadd.s32 %v748, 1
  %vm754 = vcmp.gt.s32.totalorder %v753, 0
  %v755 = vsel %vm754, %v753, 0
  %v756 = vshrl.u32 %v755, 5
  %v757 = vand.u32 %v755, 31
  %v758 = vsub.s32 32, %v757
  %v759 = vshrl.u32 683565275, %v758
  %v760 = vshll.u32 683565275, %v757
  %v761 = vshrl.u32 2475754826, %v758
  %v762 = vor.u32 %v760, %v761
  %v763 = vshll.u32 2475754826, %v757
  %v764 = vshrl.u32 2131351028, %v758
  %v765 = vor.u32 %v763, %v764
  %v766 = vshll.u32 2131351028, %v757
  %v767 = vshrl.u32 2102212464, %v758
  %v768 = vor.u32 %v766, %v767
  %v769 = vshll.u32 2102212464, %v757
  %v770 = vshrl.u32 920167782, %v758
  %v771 = vor.u32 %v769, %v770
  %v772 = vshll.u32 920167782, %v757
  %v773 = vshrl.u32 1326507024, %v758
  %v774 = vor.u32 %v772, %v773
  %vm775 = vcmp.lt.s32.totalorder %v756, 1
  %vm776 = vcmp.lt.s32.totalorder %v756, 2
  %vm777 = vcmp.lt.s32.totalorder %v756, 3
  %vm778 = vcmp.lt.s32.totalorder %v756, 4
  %v779 = vsel %vm775, %v759, %v762
  %v780 = vsel %vm778, %v768, 2102212464
  %v781 = vsel %vm777, %v765, %v780
  %v782 = vsel %vm776, %v779, %v781
  %v783 = vsel %vm775, %v762, %v765
  %v784 = vsel %vm778, %v771, 920167782
  %v785 = vsel %vm777, %v768, %v784
  %v786 = vsel %vm776, %v783, %v785
  %v787 = vsel %vm775, %v765, %v768
  %v788 = vsel %vm778, %v774, 1326507024
  %v789 = vsel %vm777, %v771, %v788
  %v790 = vsel %vm776, %v787, %v789
  %v791 = vshll.u32 %v751, 8
  %v792 = vmul.u32.u64.compose %v791, %v790
  %v793 = vextract.low.u32 %v792
  %v794 = vextract.high.u32 %v792
  %v795 = vmul.u32.u64.compose %v791, %v786
  %v796 = vextract.low.u32 %v795
  %v797 = vextract.high.u32 %v795
  %v798 = vmul.u32 %v791, %v782
  %v799 = vadd.s32 %v794, %v796
  %vm800 = vc.u32 %v794, %v796
  %v801 = vadd.s32 %v797, 1
  %v802 = vsel %vm800, %v801, %v797
  %v803 = vadd.s32 %v798, %v802
  %v804 = vadd.s32 %v803, 536870912
  %v805 = vshrl.u32 %v804, 30
  %v806 = vshll.u32 %v805, 30
  %v807 = vsub.s32 %v803, %v806
  %vm808 = vcmp.lt.s32.totalorder %v807, 0
  %v809 = vsub.s32 0, %v807
  %v810 = vsel %vm808, %v809, %v807
  %v811 = vclz %v810
  %v812 = vsub.s32 %v811, 2
  %vm813 = vcmp.gt.s32.totalorder 0, %v812
  %v814 = vsel %vm813, 0, %v812
  %v815 = vsub.s32 32, %v814
  %v816 = vshll.u32 %v807, %v814
  %v817 = vshrl.u32 %v799, %v815
  %v818 = vor.u32 %v816, %v817
  %v819 = vsub.s32 4294967266, %v814
  %v820 = vadd.s32 %v819, 127
  %v821 = vshll.u32 %v820, 23
  %v822 = vor.u32 4788187, %v821
  %v823 = vand.u32 2147483647, %v822
  %v825 = vcvt.s32.f32 %v818
  %v826 = vmul.f32 %v825, %v823
  %v827 = vxor.u32 %v826, 2147483648
  %v828 = vsel %vm745, %v827, %v826
  %v829 = vsub.s32 4, %v805
  %v830 = vsel %vm745, %v829, %v805
  %v831 = vsel %vm744, %v514, %v828
  %v832 = vsel %vm744, 0, %v830
  %v833 = vcosq.f32.pop %v831
  %v834 = vsinq.f32.pop %v831
  %vm835 = vweird.f32 %v514
  %v836 = vand.u32 %v832, 3
  %vm837 = vcmp.lt.s32.totalorder %v836, 2
  %vm838 = vcmp.eq.s32.totalorder %v836, 0
  %v839 = vxor.u32 %v834, 2147483648
  %v840 = vsel %vm838, %v833, %v839
  %vm841 = vcmp.eq.s32.totalorder %v836, 2
  %v842 = vxor.u32 %v833, 2147483648
  %v843 = vsel %vm841, %v842, %v834
  %v844 = vsel %vm837, %v840, %v843
  %v845 = vsel %vm835, nan, %v844
  %v846 = vand.u32 2147483647, %v515
  %vm847 = vcmp.le.f32.partialorder %v846, 0.7853982
  %vm848 = vcmp.lt.s32.totalorder %v515, 0
  %v849 = vand.u32 %v515, 2139095040
  %v850 = vshrl.u32 %v849, 23
  %v851 = vsub.s32 %v850, 127
  %v852 = vand.u32 2147483647, %v515
  %v853 = vand.u32 %v852, 8388607
  %v854 = vor.u32 %v853, 8388608
  %v855 = vsub.s32 0, %v854
  %v856 = vadd.s32 %v851, 1
  %vm857 = vcmp.gt.s32.totalorder %v856, 0
  %v858 = vsel %vm857, %v856, 0
  %v859 = vshrl.u32 %v858, 5
  %v860 = vand.u32 %v858, 31
  %v861 = vsub.s32 32, %v860
  %v862 = vshrl.u32 683565275, %v861
  %v863 = vshll.u32 683565275, %v860
  %v864 = vshrl.u32 2475754826, %v861
  %v865 = vor.u32 %v863, %v864
  %v866 = vshll.u32 2475754826, %v860
  %v867 = vshrl.u32 2131351028, %v861
  %v868 = vor.u32 %v866, %v867
  %v869 = vshll.u32 2131351028, %v860
  %v870 = vshrl.u32 2102212464, %v861
  %v871 = vor.u32 %v869, %v870
  %v872 = vshll.u32 2102212464, %v860
  %v873 = vshrl.u32 920167782, %v861
  %v874 = vor.u32 %v872, %v873
  %v875 = vshll.u32 920167782, %v860
  %v876 = vshrl.u32 1326507024, %v861
  %v877 = vor.u32 %v875, %v876
  %vm878 = vcmp.lt.s32.totalorder %v859, 1
  %vm879 = vcmp.lt.s32.totalorder %v859, 2
  %vm880 = vcmp.lt.s32.totalorder %v859, 3
  %vm881 = vcmp.lt.s32.totalorder %v859, 4
  %v882 = vsel %vm878, %v862, %v865
  %v883 = vsel %vm881, %v871, 2102212464
  %v884 = vsel %vm880, %v868, %v883
  %v885 = vsel %vm879, %v882, %v884
  %v886 = vsel %vm878, %v865, %v868
  %v887 = vsel %vm881, %v874, 920167782
  %v888 = vsel %vm880, %v871, %v887
  %v889 = vsel %vm879, %v886, %v888
  %v890 = vsel %vm878, %v868, %v871
  %v891 = vsel %vm881, %v877, 1326507024
  %v892 = vsel %vm880, %v874, %v891
  %v893 = vsel %vm879, %v890, %v892
  %v894 = vshll.u32 %v854, 8
  %v895 = vmul.u32.u64.compose %v894, %v893
  %v896 = vextract.low.u32 %v895
  %v897 = vextract.high.u32 %v895
  %v898 = vmul.u32.u64.compose %v894, %v889
  %v899 = vextract.low.u32 %v898
  %v900 = vextract.high.u32 %v898
  %v901 = vmul.u32 %v894, %v885
  %v902 = vadd.s32 %v897, %v899
  %vm903 = vc.u32 %v897, %v899
  %v904 = vadd.s32 %v900, 1
  %v905 = vsel %vm903, %v904, %v900
  %v906 = vadd.s32 %v901, %v905
  %v907 = vadd.s32 %v906, 536870912
  %v908 = vshrl.u32 %v907, 30
  %v909 = vshll.u32 %v908, 30
  %v910 = vsub.s32 %v906, %v909
  %vm911 = vcmp.lt.s32.totalorder %v910, 0
  %v912 = vsub.s32 0, %v910
  %v913 = vsel %vm911, %v912, %v910
  %v914 = vclz %v913
  %v915 = vsub.s32 %v914, 2
  %vm916 = vcmp.gt.s32.totalorder 0, %v915
  %v917 = vsel %vm916, 0, %v915
  %v918 = vsub.s32 32, %v917
  %v919 = vshll.u32 %v910, %v917
  %v920 = vshrl.u32 %v902, %v918
  %v921 = vor.u32 %v919, %v920
  %v922 = vsub.s32 4294967266, %v917
  %v923 = vadd.s32 %v922, 127
  %v924 = vshll.u32 %v923, 23
  %v925 = vor.u32 4788187, %v924
  %v926 = vand.u32 2147483647, %v925
  %v928 = vcvt.s32.f32 %v921
  %v929 = vmul.f32 %v928, %v926
  %v930 = vxor.u32 %v929, 2147483648
  %v931 = vsel %vm848, %v930, %v929
  %v932 = vsub.s32 4, %v908
  %v933 = vsel %vm848, %v932, %v908
  %v934 = vsel %vm847, %v515, %v931
  %v935 = vsel %vm847, 0, %v933
  %v936 = vcosq.f32.pop %v934
  %v937 = vsinq.f32.pop %v934
  %vm938 = vweird.f32 %v515
  %v939 = vand.u32 %v935, 3
  %vm940 = vcmp.lt.s32.totalorder %v939, 2
  %vm941 = vcmp.eq.s32.totalorder %v939, 0
  %v942 = vxor.u32 %v937, 2147483648
  %v943 = vsel %vm941, %v936, %v942
  %vm944 = vcmp.eq.s32.totalorder %v939, 2
  %v945 = vxor.u32 %v936, 2147483648
  %v946 = vsel %vm944, %v945, %v937
  %v947 = vsel %vm940, %v943, %v946
  %v948 = vsel %vm938, nan, %v947
  %v949 = vand.u32 2147483647, %v516
  %vm950 = vcmp.le.f32.partialorder %v949, 0.7853982
  %vm951 = vcmp.lt.s32.totalorder %v516, 0
  %v952 = vand.u32 %v516, 2139095040
  %v953 = vshrl.u32 %v952, 23
  %v954 = vsub.s32 %v953, 127
  %v955 = vand.u32 2147483647, %v516
  %v956 = vand.u32 %v955, 8388607
  %v957 = vor.u32 %v956, 8388608
  %v958 = vsub.s32 0, %v957
  %v959 = vadd.s32 %v954, 1
  %vm960 = vcmp.gt.s32.totalorder %v959, 0
  %v961 = vsel %vm960, %v959, 0
  %v962 = vshrl.u32 %v961, 5
  %v963 = vand.u32 %v961, 31
  %v964 = vsub.s32 32, %v963
  %v965 = vshrl.u32 683565275, %v964
  %v966 = vshll.u32 683565275, %v963
  %v967 = vshrl.u32 2475754826, %v964
  %v968 = vor.u32 %v966, %v967
  %v969 = vshll.u32 2475754826, %v963
  %v970 = vshrl.u32 2131351028, %v964
  %v971 = vor.u32 %v969, %v970
  %v972 = vshll.u32 2131351028, %v963
  %v973 = vshrl.u32 2102212464, %v964
  %v974 = vor.u32 %v972, %v973
  %v975 = vshll.u32 2102212464, %v963
  %v976 = vshrl.u32 920167782, %v964
  %v977 = vor.u32 %v975, %v976
  %v978 = vshll.u32 920167782, %v963
  %v979 = vshrl.u32 1326507024, %v964
  %v980 = vor.u32 %v978, %v979
  %vm981 = vcmp.lt.s32.totalorder %v962, 1
  %vm982 = vcmp.lt.s32.totalorder %v962, 2
  %vm983 = vcmp.lt.s32.totalorder %v962, 3
  %vm984 = vcmp.lt.s32.totalorder %v962, 4
  %v985 = vsel %vm981, %v965, %v968
  %v986 = vsel %vm984, %v974, 2102212464
  %v987 = vsel %vm983, %v971, %v986
  %v988 = vsel %vm982, %v985, %v987
  %v989 = vsel %vm981, %v968, %v971
  %v990 = vsel %vm984, %v977, 920167782
  %v991 = vsel %vm983, %v974, %v990
  %v992 = vsel %vm982, %v989, %v991
  %v993 = vsel %vm981, %v971, %v974
  %v994 = vsel %vm984, %v980, 1326507024
  %v995 = vsel %vm983, %v977, %v994
  %v996 = vsel %vm982, %v993, %v995
  %v997 = vshll.u32 %v957, 8
  %v998 = vmul.u32.u64.compose %v997, %v996
  %v999 = vextract.low.u32 %v998
  %v1000 = vextract.high.u32 %v998
  %v1001 = vmul.u32.u64.compose %v997, %v992
  %v1002 = vextract.low.u32 %v1001
  %v1003 = vextract.high.u32 %v1001
  %v1004 = vmul.u32 %v997, %v988
  %v1005 = vadd.s32 %v1000, %v1002
  %vm1006 = vc.u32 %v1000, %v1002
  %v1007 = vadd.s32 %v1003, 1
  %v1008 = vsel %vm1006, %v1007, %v1003
  %v1009 = vadd.s32 %v1004, %v1008
  %v1010 = vadd.s32 %v1009, 536870912
  %v1011 = vshrl.u32 %v1010, 30
  %v1012 = vshll.u32 %v1011, 30
  %v1013 = vsub.s32 %v1009, %v1012
  %vm1014 = vcmp.lt.s32.totalorder %v1013, 0
  %v1015 = vsub.s32 0, %v1013
  %v1016 = vsel %vm1014, %v1015, %v1013
  %v1017 = vclz %v1016
  %v1018 = vsub.s32 %v1017, 2
  %vm1019 = vcmp.gt.s32.totalorder 0, %v1018
  %v1020 = vsel %vm1019, 0, %v1018
  %v1021 = vsub.s32 32, %v1020
  %v1022 = vshll.u32 %v1013, %v1020
  %v1023 = vshrl.u32 %v1005, %v1021
  %v1024 = vor.u32 %v1022, %v1023
  %v1025 = vsub.s32 4294967266, %v1020
  %v1026 = vadd.s32 %v1025, 127
  %v1027 = vshll.u32 %v1026, 23
  %v1028 = vor.u32 4788187, %v1027
  %v1029 = vand.u32 2147483647, %v1028
  %v1031 = vcvt.s32.f32 %v1024
  %v1032 = vmul.f32 %v1031, %v1029
  %v1033 = vxor.u32 %v1032, 2147483648
  %v1034 = vsel %vm951, %v1033, %v1032
  %v1035 = vsub.s32 4, %v1011
  %v1036 = vsel %vm951, %v1035, %v1011
  %v1037 = vsel %vm950, %v516, %v1034
  %v1038 = vsel %vm950, 0, %v1036
  %v1039 = vcosq.f32.pop %v1037
  %v1040 = vsinq.f32.pop %v1037
  %vm1041 = vweird.f32 %v516
  %v1042 = vand.u32 %v1038, 3
  %vm1043 = vcmp.lt.s32.totalorder %v1042, 2
  %vm1044 = vcmp.eq.s32.totalorder %v1042, 0
  %v1045 = vxor.u32 %v1040, 2147483648
  %v1046 = vsel %vm1044, %v1039, %v1045
  %vm1047 = vcmp.eq.s32.totalorder %v1042, 2
  %v1048 = vxor.u32 %v1039, 2147483648
  %v1049 = vsel %vm1047, %v1048, %v1040
  %v1050 = vsel %vm1043, %v1046, %v1049
  %v1051 = vsel %vm1041, nan, %v1050
  %v1052 = vand.u32 2147483647, %v517
  %vm1053 = vcmp.le.f32.partialorder %v1052, 0.7853982
  %vm1054 = vcmp.lt.s32.totalorder %v517, 0
  %v1055 = vand.u32 %v517, 2139095040
  %v1056 = vshrl.u32 %v1055, 23
  %v1057 = vsub.s32 %v1056, 127
  %v1058 = vand.u32 2147483647, %v517
  %v1059 = vand.u32 %v1058, 8388607
  %v1060 = vor.u32 %v1059, 8388608
  %v1061 = vsub.s32 0, %v1060
  %v1062 = vadd.s32 %v1057, 1
  %vm1063 = vcmp.gt.s32.totalorder %v1062, 0
  %v1064 = vsel %vm1063, %v1062, 0
  %v1065 = vshrl.u32 %v1064, 5
  %v1066 = vand.u32 %v1064, 31
  %v1067 = vsub.s32 32, %v1066
  %v1068 = vshrl.u32 683565275, %v1067
  %v1069 = vshll.u32 683565275, %v1066
  %v1070 = vshrl.u32 2475754826, %v1067
  %v1071 = vor.u32 %v1069, %v1070
  %v1072 = vshll.u32 2475754826, %v1066
  %v1073 = vshrl.u32 2131351028, %v1067
  %v1074 = vor.u32 %v1072, %v1073
  %v1075 = vshll.u32 2131351028, %v1066
  %v1076 = vshrl.u32 2102212464, %v1067
  %v1077 = vor.u32 %v1075, %v1076
  %v1078 = vshll.u32 2102212464, %v1066
  %v1079 = vshrl.u32 920167782, %v1067
  %v1080 = vor.u32 %v1078, %v1079
  %v1081 = vshll.u32 920167782, %v1066
  %v1082 = vshrl.u32 1326507024, %v1067
  %v1083 = vor.u32 %v1081, %v1082
  %vm1084 = vcmp.lt.s32.totalorder %v1065, 1
  %vm1085 = vcmp.lt.s32.totalorder %v1065, 2
  %vm1086 = vcmp.lt.s32.totalorder %v1065, 3
  %vm1087 = vcmp.lt.s32.totalorder %v1065, 4
  %v1088 = vsel %vm1084, %v1068, %v1071
  %v1089 = vsel %vm1087, %v1077, 2102212464
  %v1090 = vsel %vm1086, %v1074, %v1089
  %v1091 = vsel %vm1085, %v1088, %v1090
  %v1092 = vsel %vm1084, %v1071, %v1074
  %v1093 = vsel %vm1087, %v1080, 920167782
  %v1094 = vsel %vm1086, %v1077, %v1093
  %v1095 = vsel %vm1085, %v1092, %v1094
  %v1096 = vsel %vm1084, %v1074, %v1077
  %v1097 = vsel %vm1087, %v1083, 1326507024
  %v1098 = vsel %vm1086, %v1080, %v1097
  %v1099 = vsel %vm1085, %v1096, %v1098
  %v1100 = vshll.u32 %v1060, 8
  %v1101 = vmul.u32.u64.compose %v1100, %v1099
  %v1102 = vextract.low.u32 %v1101
  %v1103 = vextract.high.u32 %v1101
  %v1104 = vmul.u32.u64.compose %v1100, %v1095
  %v1105 = vextract.low.u32 %v1104
  %v1106 = vextract.high.u32 %v1104
  %v1107 = vmul.u32 %v1100, %v1091
  %v1108 = vadd.s32 %v1103, %v1105
  %vm1109 = vc.u32 %v1103, %v1105
  %v1110 = vadd.s32 %v1106, 1
  %v1111 = vsel %vm1109, %v1110, %v1106
  %v1112 = vadd.s32 %v1107, %v1111
  %v1113 = vadd.s32 %v1112, 536870912
  %v1114 = vshrl.u32 %v1113, 30
  %v1115 = vshll.u32 %v1114, 30
  %v1116 = vsub.s32 %v1112, %v1115
  %vm1117 = vcmp.lt.s32.totalorder %v1116, 0
  %v1118 = vsub.s32 0, %v1116
  %v1119 = vsel %vm1117, %v1118, %v1116
  %v1120 = vclz %v1119
  %v1121 = vsub.s32 %v1120, 2
  %vm1122 = vcmp.gt.s32.totalorder 0, %v1121
  %v1123 = vsel %vm1122, 0, %v1121
  %v1124 = vsub.s32 32, %v1123
  %v1125 = vshll.u32 %v1116, %v1123
  %v1126 = vshrl.u32 %v1108, %v1124
  %v1127 = vor.u32 %v1125, %v1126
  %v1128 = vsub.s32 4294967266, %v1123
  %v1129 = vadd.s32 %v1128, 127
  %v1130 = vshll.u32 %v1129, 23
  %v1131 = vor.u32 4788187, %v1130
  %v1132 = vand.u32 2147483647, %v1131
  %v1134 = vcvt.s32.f32 %v1127
  %v1135 = vmul.f32 %v1134, %v1132
  %v1136 = vxor.u32 %v1135, 2147483648
  %v1137 = vsel %vm1054, %v1136, %v1135
  %v1138 = vsub.s32 4, %v1114
  %v1139 = vsel %vm1054, %v1138, %v1114
  %v1140 = vsel %vm1053, %v517, %v1137
  %v1141 = vsel %vm1053, 0, %v1139
  %v1142 = vcosq.f32.pop %v1140
  %v1143 = vsinq.f32.pop %v1140
  %vm1144 = vweird.f32 %v517
  %v1145 = vand.u32 %v1141, 3
  %vm1146 = vcmp.lt.s32.totalorder %v1145, 2
  %vm1147 = vcmp.eq.s32.totalorder %v1145, 0
  %v1148 = vxor.u32 %v1143, 2147483648
  %v1149 = vsel %vm1147, %v1142, %v1148
  %vm1150 = vcmp.eq.s32.totalorder %v1145, 2
  %v1151 = vxor.u32 %v1142, 2147483648
  %v1152 = vsel %vm1150, %v1151, %v1143
  %v1153 = vsel %vm1146, %v1149, %v1152
  %v1154 = vsel %vm1144, nan, %v1153
  %v1155 = vand.u32 2147483647, %v518
  %vm1156 = vcmp.le.f32.partialorder %v1155, 0.7853982
  %vm1157 = vcmp.lt.s32.totalorder %v518, 0
  %v1158 = vand.u32 %v518, 2139095040
  %v1159 = vshrl.u32 %v1158, 23
  %v1160 = vsub.s32 %v1159, 127
  %v1161 = vand.u32 2147483647, %v518
  %v1162 = vand.u32 %v1161, 8388607
  %v1163 = vor.u32 %v1162, 8388608
  %v1164 = vsub.s32 0, %v1163
  %v1165 = vadd.s32 %v1160, 1
  %vm1166 = vcmp.gt.s32.totalorder %v1165, 0
  %v1167 = vsel %vm1166, %v1165, 0
  %v1168 = vshrl.u32 %v1167, 5
  %v1169 = vand.u32 %v1167, 31
  %v1170 = vsub.s32 32, %v1169
  %v1171 = vshrl.u32 683565275, %v1170
  %v1172 = vshll.u32 683565275, %v1169
  %v1173 = vshrl.u32 2475754826, %v1170
  %v1174 = vor.u32 %v1172, %v1173
  %v1175 = vshll.u32 2475754826, %v1169
  %v1176 = vshrl.u32 2131351028, %v1170
  %v1177 = vor.u32 %v1175, %v1176
  %v1178 = vshll.u32 2131351028, %v1169
  %v1179 = vshrl.u32 2102212464, %v1170
  %v1180 = vor.u32 %v1178, %v1179
  %v1181 = vshll.u32 2102212464, %v1169
  %v1182 = vshrl.u32 920167782, %v1170
  %v1183 = vor.u32 %v1181, %v1182
  %v1184 = vshll.u32 920167782, %v1169
  %v1185 = vshrl.u32 1326507024, %v1170
  %v1186 = vor.u32 %v1184, %v1185
  %vm1187 = vcmp.lt.s32.totalorder %v1168, 1
  %vm1188 = vcmp.lt.s32.totalorder %v1168, 2
  %vm1189 = vcmp.lt.s32.totalorder %v1168, 3
  %vm1190 = vcmp.lt.s32.totalorder %v1168, 4
  %v1191 = vsel %vm1187, %v1171, %v1174
  %v1192 = vsel %vm1190, %v1180, 2102212464
  %v1193 = vsel %vm1189, %v1177, %v1192
  %v1194 = vsel %vm1188, %v1191, %v1193
  %v1195 = vsel %vm1187, %v1174, %v1177
  %v1196 = vsel %vm1190, %v1183, 920167782
  %v1197 = vsel %vm1189, %v1180, %v1196
  %v1198 = vsel %vm1188, %v1195, %v1197
  %v1199 = vsel %vm1187, %v1177, %v1180
  %v1200 = vsel %vm1190, %v1186, 1326507024
  %v1201 = vsel %vm1189, %v1183, %v1200
  %v1202 = vsel %vm1188, %v1199, %v1201
  %v1203 = vshll.u32 %v1163, 8
  %v1204 = vmul.u32.u64.compose %v1203, %v1202
  %v1205 = vextract.low.u32 %v1204
  %v1206 = vextract.high.u32 %v1204
  %v1207 = vmul.u32.u64.compose %v1203, %v1198
  %v1208 = vextract.low.u32 %v1207
  %v1209 = vextract.high.u32 %v1207
  %v1210 = vmul.u32 %v1203, %v1194
  %v1211 = vadd.s32 %v1206, %v1208
  %vm1212 = vc.u32 %v1206, %v1208
  %v1213 = vadd.s32 %v1209, 1
  %v1214 = vsel %vm1212, %v1213, %v1209
  %v1215 = vadd.s32 %v1210, %v1214
  %v1216 = vadd.s32 %v1215, 536870912
  %v1217 = vshrl.u32 %v1216, 30
  %v1218 = vshll.u32 %v1217, 30
  %v1219 = vsub.s32 %v1215, %v1218
  %vm1220 = vcmp.lt.s32.totalorder %v1219, 0
  %v1221 = vsub.s32 0, %v1219
  %v1222 = vsel %vm1220, %v1221, %v1219
  %v1223 = vclz %v1222
  %v1224 = vsub.s32 %v1223, 2
  %vm1225 = vcmp.gt.s32.totalorder 0, %v1224
  %v1226 = vsel %vm1225, 0, %v1224
  %v1227 = vsub.s32 32, %v1226
  %v1228 = vshll.u32 %v1219, %v1226
  %v1229 = vshrl.u32 %v1211, %v1227
  %v1230 = vor.u32 %v1228, %v1229
  %v1231 = vsub.s32 4294967266, %v1226
  %v1232 = vadd.s32 %v1231, 127
  %v1233 = vshll.u32 %v1232, 23
  %v1234 = vor.u32 4788187, %v1233
  %v1235 = vand.u32 2147483647, %v1234
  %v1237 = vcvt.s32.f32 %v1230
  %v1238 = vmul.f32 %v1237, %v1235
  %v1239 = vxor.u32 %v1238, 2147483648
  %v1240 = vsel %vm1157, %v1239, %v1238
  %v1241 = vsub.s32 4, %v1217
  %v1242 = vsel %vm1157, %v1241, %v1217
  %v1243 = vsel %vm1156, %v518, %v1240
  %v1244 = vsel %vm1156, 0, %v1242
  %v1245 = vcosq.f32.pop %v1243
  %v1246 = vsinq.f32.pop %v1243
  %vm1247 = vweird.f32 %v518
  %v1248 = vand.u32 %v1244, 3
  %vm1249 = vcmp.lt.s32.totalorder %v1248, 2
  %vm1250 = vcmp.eq.s32.totalorder %v1248, 0
  %v1251 = vxor.u32 %v1246, 2147483648
  %v1252 = vsel %vm1250, %v1245, %v1251
  %vm1253 = vcmp.eq.s32.totalorder %v1248, 2
  %v1254 = vxor.u32 %v1245, 2147483648
  %v1255 = vsel %vm1253, %v1254, %v1246
  %v1256 = vsel %vm1249, %v1252, %v1255
  %v1257 = vsel %vm1247, nan, %v1256
  %v1258 = vand.u32 2147483647, %v519
  %vm1259 = vcmp.le.f32.partialorder %v1258, 0.7853982
  %vm1260 = vcmp.lt.s32.totalorder %v519, 0
  %v1261 = vand.u32 %v519, 2139095040
  %v1262 = vshrl.u32 %v1261, 23
  %v1263 = vsub.s32 %v1262, 127
  %v1264 = vand.u32 2147483647, %v519
  %v1265 = vand.u32 %v1264, 8388607
  %v1266 = vor.u32 %v1265, 8388608
  %v1267 = vsub.s32 0, %v1266
  %v1268 = vadd.s32 %v1263, 1
  %vm1269 = vcmp.gt.s32.totalorder %v1268, 0
  %v1270 = vsel %vm1269, %v1268, 0
  %v1271 = vshrl.u32 %v1270, 5
  %v1272 = vand.u32 %v1270, 31
  %v1273 = vsub.s32 32, %v1272
  %v1274 = vshrl.u32 683565275, %v1273
  %v1275 = vshll.u32 683565275, %v1272
  %v1276 = vshrl.u32 2475754826, %v1273
  %v1277 = vor.u32 %v1275, %v1276
  %v1278 = vshll.u32 2475754826, %v1272
  %v1279 = vshrl.u32 2131351028, %v1273
  %v1280 = vor.u32 %v1278, %v1279
  %v1281 = vshll.u32 2131351028, %v1272
  %v1282 = vshrl.u32 2102212464, %v1273
  %v1283 = vor.u32 %v1281, %v1282
  %v1284 = vshll.u32 2102212464, %v1272
  %v1285 = vshrl.u32 920167782, %v1273
  %v1286 = vor.u32 %v1284, %v1285
  %v1287 = vshll.u32 920167782, %v1272
  %v1288 = vshrl.u32 1326507024, %v1273
  %v1289 = vor.u32 %v1287, %v1288
  %vm1290 = vcmp.lt.s32.totalorder %v1271, 1
  %vm1291 = vcmp.lt.s32.totalorder %v1271, 2
  %vm1292 = vcmp.lt.s32.totalorder %v1271, 3
  %vm1293 = vcmp.lt.s32.totalorder %v1271, 4
  %v1294 = vsel %vm1290, %v1274, %v1277
  %v1295 = vsel %vm1293, %v1283, 2102212464
  %v1296 = vsel %vm1292, %v1280, %v1295
  %v1297 = vsel %vm1291, %v1294, %v1296
  %v1298 = vsel %vm1290, %v1277, %v1280
  %v1299 = vsel %vm1293, %v1286, 920167782
  %v1300 = vsel %vm1292, %v1283, %v1299
  %v1301 = vsel %vm1291, %v1298, %v1300
  %v1302 = vsel %vm1290, %v1280, %v1283
  %v1303 = vsel %vm1293, %v1289, 1326507024
  %v1304 = vsel %vm1292, %v1286, %v1303
  %v1305 = vsel %vm1291, %v1302, %v1304
  %v1306 = vshll.u32 %v1266, 8
  %v1307 = vmul.u32.u64.compose %v1306, %v1305
  %v1308 = vextract.low.u32 %v1307
  %v1309 = vextract.high.u32 %v1307
  %v1310 = vmul.u32.u64.compose %v1306, %v1301
  %v1311 = vextract.low.u32 %v1310
  %v1312 = vextract.high.u32 %v1310
  %v1313 = vmul.u32 %v1306, %v1297
  %v1314 = vadd.s32 %v1309, %v1311
  %vm1315 = vc.u32 %v1309, %v1311
  %v1316 = vadd.s32 %v1312, 1
  %v1317 = vsel %vm1315, %v1316, %v1312
  %v1318 = vadd.s32 %v1313, %v1317
  %v1319 = vadd.s32 %v1318, 536870912
  %v1320 = vshrl.u32 %v1319, 30
  %v1321 = vshll.u32 %v1320, 30
  %v1322 = vsub.s32 %v1318, %v1321
  %vm1323 = vcmp.lt.s32.totalorder %v1322, 0
  %v1324 = vsub.s32 0, %v1322
  %v1325 = vsel %vm1323, %v1324, %v1322
  %v1326 = vclz %v1325
  %v1327 = vsub.s32 %v1326, 2
  %vm1328 = vcmp.gt.s32.totalorder 0, %v1327
  %v1329 = vsel %vm1328, 0, %v1327
  %v1330 = vsub.s32 32, %v1329
  %v1331 = vshll.u32 %v1322, %v1329
  %v1332 = vshrl.u32 %v1314, %v1330
  %v1333 = vor.u32 %v1331, %v1332
  %v1334 = vsub.s32 4294967266, %v1329
  %v1335 = vadd.s32 %v1334, 127
  %v1336 = vshll.u32 %v1335, 23
  %v1337 = vor.u32 4788187, %v1336
  %v1338 = vand.u32 2147483647, %v1337
  %v1340 = vcvt.s32.f32 %v1333
  %v1341 = vmul.f32 %v1340, %v1338
  %v1342 = vxor.u32 %v1341, 2147483648
  %v1343 = vsel %vm1260, %v1342, %v1341
  %v1344 = vsub.s32 4, %v1320
  %v1345 = vsel %vm1260, %v1344, %v1320
  %v1346 = vsel %vm1259, %v519, %v1343
  %v1347 = vsel %vm1259, 0, %v1345
  %v1348 = vcosq.f32.pop %v1346
  %v1349 = vsinq.f32.pop %v1346
  %vm1350 = vweird.f32 %v519
  %v1351 = vand.u32 %v1347, 3
  %vm1352 = vcmp.lt.s32.totalorder %v1351, 2
  %vm1353 = vcmp.eq.s32.totalorder %v1351, 0
  %v1354 = vxor.u32 %v1349, 2147483648
  %v1355 = vsel %vm1353, %v1348, %v1354
  %vm1356 = vcmp.eq.s32.totalorder %v1351, 2
  %v1357 = vxor.u32 %v1348, 2147483648
  %v1358 = vsel %vm1356, %v1357, %v1349
  %v1359 = vsel %vm1352, %v1355, %v1358
  %v1360 = vsel %vm1350, nan, %v1359
  %v1361 = vand.u32 2147483647, %v520
  %vm1362 = vcmp.le.f32.partialorder %v1361, 0.7853982
  %vm1363 = vcmp.lt.s32.totalorder %v520, 0
  %v1364 = vand.u32 %v520, 2139095040
  %v1365 = vshrl.u32 %v1364, 23
  %v1366 = vsub.s32 %v1365, 127
  %v1367 = vand.u32 2147483647, %v520
  %v1368 = vand.u32 %v1367, 8388607
  %v1369 = vor.u32 %v1368, 8388608
  %v1370 = vsub.s32 0, %v1369
  %v1371 = vadd.s32 %v1366, 1
  %vm1372 = vcmp.gt.s32.totalorder %v1371, 0
  %v1373 = vsel %vm1372, %v1371, 0
  %v1374 = vshrl.u32 %v1373, 5
  %v1375 = vand.u32 %v1373, 31
  %v1376 = vsub.s32 32, %v1375
  %v1377 = vshrl.u32 683565275, %v1376
  %v1378 = vshll.u32 683565275, %v1375
  %v1379 = vshrl.u32 2475754826, %v1376
  %v1380 = vor.u32 %v1378, %v1379
  %v1381 = vshll.u32 2475754826, %v1375
  %v1382 = vshrl.u32 2131351028, %v1376
  %v1383 = vor.u32 %v1381, %v1382
  %v1384 = vshll.u32 2131351028, %v1375
  %v1385 = vshrl.u32 2102212464, %v1376
  %v1386 = vor.u32 %v1384, %v1385
  %v1387 = vshll.u32 2102212464, %v1375
  %v1388 = vshrl.u32 920167782, %v1376
  %v1389 = vor.u32 %v1387, %v1388
  %v1390 = vshll.u32 920167782, %v1375
  %v1391 = vshrl.u32 1326507024, %v1376
  %v1392 = vor.u32 %v1390, %v1391
  %vm1393 = vcmp.lt.s32.totalorder %v1374, 1
  %vm1394 = vcmp.lt.s32.totalorder %v1374, 2
  %vm1395 = vcmp.lt.s32.totalorder %v1374, 3
  %vm1396 = vcmp.lt.s32.totalorder %v1374, 4
  %v1397 = vsel %vm1393, %v1377, %v1380
  %v1398 = vsel %vm1396, %v1386, 2102212464
  %v1399 = vsel %vm1395, %v1383, %v1398
  %v1400 = vsel %vm1394, %v1397, %v1399
  %v1401 = vsel %vm1393, %v1380, %v1383
  %v1402 = vsel %vm1396, %v1389, 920167782
  %v1403 = vsel %vm1395, %v1386, %v1402
  %v1404 = vsel %vm1394, %v1401, %v1403
  %v1405 = vsel %vm1393, %v1383, %v1386
  %v1406 = vsel %vm1396, %v1392, 1326507024
  %v1407 = vsel %vm1395, %v1389, %v1406
  %v1408 = vsel %vm1394, %v1405, %v1407
  %v1409 = vshll.u32 %v1369, 8
  %v1410 = vmul.u32.u64.compose %v1409, %v1408
  %v1411 = vextract.low.u32 %v1410
  %v1412 = vextract.high.u32 %v1410
  %v1413 = vmul.u32.u64.compose %v1409, %v1404
  %v1414 = vextract.low.u32 %v1413
  %v1415 = vextract.high.u32 %v1413
  %v1416 = vmul.u32 %v1409, %v1400
  %v1417 = vadd.s32 %v1412, %v1414
  %vm1418 = vc.u32 %v1412, %v1414
  %v1419 = vadd.s32 %v1415, 1
  %v1420 = vsel %vm1418, %v1419, %v1415
  %v1421 = vadd.s32 %v1416, %v1420
  %v1422 = vadd.s32 %v1421, 536870912
  %v1423 = vshrl.u32 %v1422, 30
  %v1424 = vshll.u32 %v1423, 30
  %v1425 = vsub.s32 %v1421, %v1424
  %vm1426 = vcmp.lt.s32.totalorder %v1425, 0
  %v1427 = vsub.s32 0, %v1425
  %v1428 = vsel %vm1426, %v1427, %v1425
  %v1429 = vclz %v1428
  %v1430 = vsub.s32 %v1429, 2
  %vm1431 = vcmp.gt.s32.totalorder 0, %v1430
  %v1432 = vsel %vm1431, 0, %v1430
  %v1433 = vsub.s32 32, %v1432
  %v1434 = vshll.u32 %v1425, %v1432
  %v1435 = vshrl.u32 %v1417, %v1433
  %v1436 = vor.u32 %v1434, %v1435
  %v1437 = vsub.s32 4294967266, %v1432
  %v1438 = vadd.s32 %v1437, 127
  %v1439 = vshll.u32 %v1438, 23
  %v1440 = vor.u32 4788187, %v1439
  %v1441 = vand.u32 2147483647, %v1440
  %v1443 = vcvt.s32.f32 %v1436
  %v1444 = vmul.f32 %v1443, %v1441
  %v1445 = vxor.u32 %v1444, 2147483648
  %v1446 = vsel %vm1363, %v1445, %v1444
  %v1447 = vsub.s32 4, %v1423
  %v1448 = vsel %vm1363, %v1447, %v1423
  %v1449 = vsel %vm1362, %v520, %v1446
  %v1450 = vsel %vm1362, 0, %v1448
  %v1451 = vcosq.f32.pop %v1449
  %v1452 = vsinq.f32.pop %v1449
  %vm1453 = vweird.f32 %v520
  %v1454 = vand.u32 %v1450, 3
  %vm1455 = vcmp.lt.s32.totalorder %v1454, 2
  %vm1456 = vcmp.eq.s32.totalorder %v1454, 0
  %v1457 = vxor.u32 %v1452, 2147483648
  %v1458 = vsel %vm1456, %v1451, %v1457
  %vm1459 = vcmp.eq.s32.totalorder %v1454, 2
  %v1460 = vxor.u32 %v1451, 2147483648
  %v1461 = vsel %vm1459, %v1460, %v1452
  %v1462 = vsel %vm1455, %v1458, %v1461
  %v1463 = vsel %vm1453, nan, %v1462
  %v1464 = vand.u32 2147483647, %v521
  %vm1465 = vcmp.le.f32.partialorder %v1464, 0.7853982
  %vm1466 = vcmp.lt.s32.totalorder %v521, 0
  %v1467 = vand.u32 %v521, 2139095040
  %v1468 = vshrl.u32 %v1467, 23
  %v1469 = vsub.s32 %v1468, 127
  %v1470 = vand.u32 2147483647, %v521
  %v1471 = vand.u32 %v1470, 8388607
  %v1472 = vor.u32 %v1471, 8388608
  %v1473 = vsub.s32 0, %v1472
  %v1474 = vadd.s32 %v1469, 1
  %vm1475 = vcmp.gt.s32.totalorder %v1474, 0
  %v1476 = vsel %vm1475, %v1474, 0
  %v1477 = vshrl.u32 %v1476, 5
  %v1478 = vand.u32 %v1476, 31
  %v1479 = vsub.s32 32, %v1478
  %v1480 = vshrl.u32 683565275, %v1479
  %v1481 = vshll.u32 683565275, %v1478
  %v1482 = vshrl.u32 2475754826, %v1479
  %v1483 = vor.u32 %v1481, %v1482
  %v1484 = vshll.u32 2475754826, %v1478
  %v1485 = vshrl.u32 2131351028, %v1479
  %v1486 = vor.u32 %v1484, %v1485
  %v1487 = vshll.u32 2131351028, %v1478
  %v1488 = vshrl.u32 2102212464, %v1479
  %v1489 = vor.u32 %v1487, %v1488
  %v1490 = vshll.u32 2102212464, %v1478
  %v1491 = vshrl.u32 920167782, %v1479
  %v1492 = vor.u32 %v1490, %v1491
  %v1493 = vshll.u32 920167782, %v1478
  %v1494 = vshrl.u32 1326507024, %v1479
  %v1495 = vor.u32 %v1493, %v1494
  %vm1496 = vcmp.lt.s32.totalorder %v1477, 1
  %vm1497 = vcmp.lt.s32.totalorder %v1477, 2
  %vm1498 = vcmp.lt.s32.totalorder %v1477, 3
  %vm1499 = vcmp.lt.s32.totalorder %v1477, 4
  %v1500 = vsel %vm1496, %v1480, %v1483
  %v1501 = vsel %vm1499, %v1489, 2102212464
  %v1502 = vsel %vm1498, %v1486, %v1501
  %v1503 = vsel %vm1497, %v1500, %v1502
  %v1504 = vsel %vm1496, %v1483, %v1486
  %v1505 = vsel %vm1499, %v1492, 920167782
  %v1506 = vsel %vm1498, %v1489, %v1505
  %v1507 = vsel %vm1497, %v1504, %v1506
  %v1508 = vsel %vm1496, %v1486, %v1489
  %v1509 = vsel %vm1499, %v1495, 1326507024
  %v1510 = vsel %vm1498, %v1492, %v1509
  %v1511 = vsel %vm1497, %v1508, %v1510
  %v1512 = vshll.u32 %v1472, 8
  %v1513 = vmul.u32.u64.compose %v1512, %v1511
  %v1514 = vextract.low.u32 %v1513
  %v1515 = vextract.high.u32 %v1513
  %v1516 = vmul.u32.u64.compose %v1512, %v1507
  %v1517 = vextract.low.u32 %v1516
  %v1518 = vextract.high.u32 %v1516
  %v1519 = vmul.u32 %v1512, %v1503
  %v1520 = vadd.s32 %v1515, %v1517
  %vm1521 = vc.u32 %v1515, %v1517
  %v1522 = vadd.s32 %v1518, 1
  %v1523 = vsel %vm1521, %v1522, %v1518
  %v1524 = vadd.s32 %v1519, %v1523
  %v1525 = vadd.s32 %v1524, 536870912
  %v1526 = vshrl.u32 %v1525, 30
  %v1527 = vshll.u32 %v1526, 30
  %v1528 = vsub.s32 %v1524, %v1527
  %vm1529 = vcmp.lt.s32.totalorder %v1528, 0
  %v1530 = vsub.s32 0, %v1528
  %v1531 = vsel %vm1529, %v1530, %v1528
  %v1532 = vclz %v1531
  %v1533 = vsub.s32 %v1532, 2
  %vm1534 = vcmp.gt.s32.totalorder 0, %v1533
  %v1535 = vsel %vm1534, 0, %v1533
  %v1536 = vsub.s32 32, %v1535
  %v1537 = vshll.u32 %v1528, %v1535
  %v1538 = vshrl.u32 %v1520, %v1536
  %v1539 = vor.u32 %v1537, %v1538
  %v1540 = vsub.s32 4294967266, %v1535
  %v1541 = vadd.s32 %v1540, 127
  %v1542 = vshll.u32 %v1541, 23
  %v1543 = vor.u32 4788187, %v1542
  %v1544 = vand.u32 2147483647, %v1543
  %v1546 = vcvt.s32.f32 %v1539
  %v1547 = vmul.f32 %v1546, %v1544
  %v1548 = vxor.u32 %v1547, 2147483648
  %v1549 = vsel %vm1466, %v1548, %v1547
  %v1550 = vsub.s32 4, %v1526
  %v1551 = vsel %vm1466, %v1550, %v1526
  %v1552 = vsel %vm1465, %v521, %v1549
  %v1553 = vsel %vm1465, 0, %v1551
  %v1554 = vcosq.f32.pop %v1552
  %v1555 = vsinq.f32.pop %v1552
  %vm1556 = vweird.f32 %v521
  %v1557 = vand.u32 %v1553, 3
  %vm1558 = vcmp.lt.s32.totalorder %v1557, 2
  %vm1559 = vcmp.eq.s32.totalorder %v1557, 0
  %v1560 = vxor.u32 %v1555, 2147483648
  %v1561 = vsel %vm1559, %v1554, %v1560
  %vm1562 = vcmp.eq.s32.totalorder %v1557, 2
  %v1563 = vxor.u32 %v1554, 2147483648
  %v1564 = vsel %vm1562, %v1563, %v1555
  %v1565 = vsel %vm1558, %v1561, %v1564
  %v1566 = vsel %vm1556, nan, %v1565
  %v1567 = vand.u32 2147483647, %v522
  %vm1568 = vcmp.le.f32.partialorder %v1567, 0.7853982
  %vm1569 = vcmp.lt.s32.totalorder %v522, 0
  %v1570 = vand.u32 %v522, 2139095040
  %v1571 = vshrl.u32 %v1570, 23
  %v1572 = vsub.s32 %v1571, 127
  %v1573 = vand.u32 2147483647, %v522
  %v1574 = vand.u32 %v1573, 8388607
  %v1575 = vor.u32 %v1574, 8388608
  %v1576 = vsub.s32 0, %v1575
  %v1577 = vadd.s32 %v1572, 1
  %vm1578 = vcmp.gt.s32.totalorder %v1577, 0
  %v1579 = vsel %vm1578, %v1577, 0
  %v1580 = vshrl.u32 %v1579, 5
  %v1581 = vand.u32 %v1579, 31
  %v1582 = vsub.s32 32, %v1581
  %v1583 = vshrl.u32 683565275, %v1582
  %v1584 = vshll.u32 683565275, %v1581
  %v1585 = vshrl.u32 2475754826, %v1582
  %v1586 = vor.u32 %v1584, %v1585
  %v1587 = vshll.u32 2475754826, %v1581
  %v1588 = vshrl.u32 2131351028, %v1582
  %v1589 = vor.u32 %v1587, %v1588
  %v1590 = vshll.u32 2131351028, %v1581
  %v1591 = vshrl.u32 2102212464, %v1582
  %v1592 = vor.u32 %v1590, %v1591
  %v1593 = vshll.u32 2102212464, %v1581
  %v1594 = vshrl.u32 920167782, %v1582
  %v1595 = vor.u32 %v1593, %v1594
  %v1596 = vshll.u32 920167782, %v1581
  %v1597 = vshrl.u32 1326507024, %v1582
  %v1598 = vor.u32 %v1596, %v1597
  %vm1599 = vcmp.lt.s32.totalorder %v1580, 1
  %vm1600 = vcmp.lt.s32.totalorder %v1580, 2
  %vm1601 = vcmp.lt.s32.totalorder %v1580, 3
  %vm1602 = vcmp.lt.s32.totalorder %v1580, 4
  %v1603 = vsel %vm1599, %v1583, %v1586
  %v1604 = vsel %vm1602, %v1592, 2102212464
  %v1605 = vsel %vm1601, %v1589, %v1604
  %v1606 = vsel %vm1600, %v1603, %v1605
  %v1607 = vsel %vm1599, %v1586, %v1589
  %v1608 = vsel %vm1602, %v1595, 920167782
  %v1609 = vsel %vm1601, %v1592, %v1608
  %v1610 = vsel %vm1600, %v1607, %v1609
  %v1611 = vsel %vm1599, %v1589, %v1592
  %v1612 = vsel %vm1602, %v1598, 1326507024
  %v1613 = vsel %vm1601, %v1595, %v1612
  %v1614 = vsel %vm1600, %v1611, %v1613
  %v1615 = vshll.u32 %v1575, 8
  %v1616 = vmul.u32.u64.compose %v1615, %v1614
  %v1617 = vextract.low.u32 %v1616
  %v1618 = vextract.high.u32 %v1616
  %v1619 = vmul.u32.u64.compose %v1615, %v1610
  %v1620 = vextract.low.u32 %v1619
  %v1621 = vextract.high.u32 %v1619
  %v1622 = vmul.u32 %v1615, %v1606
  %v1623 = vadd.s32 %v1618, %v1620
  %vm1624 = vc.u32 %v1618, %v1620
  %v1625 = vadd.s32 %v1621, 1
  %v1626 = vsel %vm1624, %v1625, %v1621
  %v1627 = vadd.s32 %v1622, %v1626
  %v1628 = vadd.s32 %v1627, 536870912
  %v1629 = vshrl.u32 %v1628, 30
  %v1630 = vshll.u32 %v1629, 30
  %v1631 = vsub.s32 %v1627, %v1630
  %vm1632 = vcmp.lt.s32.totalorder %v1631, 0
  %v1633 = vsub.s32 0, %v1631
  %v1634 = vsel %vm1632, %v1633, %v1631
  %v1635 = vclz %v1634
  %v1636 = vsub.s32 %v1635, 2
  %vm1637 = vcmp.gt.s32.totalorder 0, %v1636
  %v1638 = vsel %vm1637, 0, %v1636
  %v1639 = vsub.s32 32, %v1638
  %v1640 = vshll.u32 %v1631, %v1638
  %v1641 = vshrl.u32 %v1623, %v1639
  %v1642 = vor.u32 %v1640, %v1641
  %v1643 = vsub.s32 4294967266, %v1638
  %v1644 = vadd.s32 %v1643, 127
  %v1645 = vshll.u32 %v1644, 23
  %v1646 = vor.u32 4788187, %v1645
  %v1647 = vand.u32 2147483647, %v1646
  %v1649 = vcvt.s32.f32 %v1642
  %v1650 = vmul.f32 %v1649, %v1647
  %v1651 = vxor.u32 %v1650, 2147483648
  %v1652 = vsel %vm1569, %v1651, %v1650
  %v1653 = vsub.s32 4, %v1629
  %v1654 = vsel %vm1569, %v1653, %v1629
  %v1655 = vsel %vm1568, %v522, %v1652
  %v1656 = vsel %vm1568, 0, %v1654
  %v1657 = vcosq.f32.pop %v1655
  %v1658 = vsinq.f32.pop %v1655
  %vm1659 = vweird.f32 %v522
  %v1660 = vand.u32 %v1656, 3
  %vm1661 = vcmp.lt.s32.totalorder %v1660, 2
  %vm1662 = vcmp.eq.s32.totalorder %v1660, 0
  %v1663 = vxor.u32 %v1658, 2147483648
  %v1664 = vsel %vm1662, %v1657, %v1663
  %vm1665 = vcmp.eq.s32.totalorder %v1660, 2
  %v1666 = vxor.u32 %v1657, 2147483648
  %v1667 = vsel %vm1665, %v1666, %v1658
  %v1668 = vsel %vm1661, %v1664, %v1667
  %v1669 = vsel %vm1659, nan, %v1668
  %v1670 = vand.u32 2147483647, %v523
  %vm1671 = vcmp.le.f32.partialorder %v1670, 0.7853982
  %vm1672 = vcmp.lt.s32.totalorder %v523, 0
  %v1673 = vand.u32 %v523, 2139095040
  %v1674 = vshrl.u32 %v1673, 23
  %v1675 = vsub.s32 %v1674, 127
  %v1676 = vand.u32 2147483647, %v523
  %v1677 = vand.u32 %v1676, 8388607
  %v1678 = vor.u32 %v1677, 8388608
  %v1679 = vsub.s32 0, %v1678
  %v1680 = vadd.s32 %v1675, 1
  %vm1681 = vcmp.gt.s32.totalorder %v1680, 0
  %v1682 = vsel %vm1681, %v1680, 0
  %v1683 = vshrl.u32 %v1682, 5
  %v1684 = vand.u32 %v1682, 31
  %v1685 = vsub.s32 32, %v1684
  %v1686 = vshrl.u32 683565275, %v1685
  %v1687 = vshll.u32 683565275, %v1684
  %v1688 = vshrl.u32 2475754826, %v1685
  %v1689 = vor.u32 %v1687, %v1688
  %v1690 = vshll.u32 2475754826, %v1684
  %v1691 = vshrl.u32 2131351028, %v1685
  %v1692 = vor.u32 %v1690, %v1691
  %v1693 = vshll.u32 2131351028, %v1684
  %v1694 = vshrl.u32 2102212464, %v1685
  %v1695 = vor.u32 %v1693, %v1694
  %v1696 = vshll.u32 2102212464, %v1684
  %v1697 = vshrl.u32 920167782, %v1685
  %v1698 = vor.u32 %v1696, %v1697
  %v1699 = vshll.u32 920167782, %v1684
  %v1700 = vshrl.u32 1326507024, %v1685
  %v1701 = vor.u32 %v1699, %v1700
  %vm1702 = vcmp.lt.s32.totalorder %v1683, 1
  %vm1703 = vcmp.lt.s32.totalorder %v1683, 2
  %vm1704 = vcmp.lt.s32.totalorder %v1683, 3
  %vm1705 = vcmp.lt.s32.totalorder %v1683, 4
  %v1706 = vsel %vm1702, %v1686, %v1689
  %v1707 = vsel %vm1705, %v1695, 2102212464
  %v1708 = vsel %vm1704, %v1692, %v1707
  %v1709 = vsel %vm1703, %v1706, %v1708
  %v1710 = vsel %vm1702, %v1689, %v1692
  %v1711 = vsel %vm1705, %v1698, 920167782
  %v1712 = vsel %vm1704, %v1695, %v1711
  %v1713 = vsel %vm1703, %v1710, %v1712
  %v1714 = vsel %vm1702, %v1692, %v1695
  %v1715 = vsel %vm1705, %v1701, 1326507024
  %v1716 = vsel %vm1704, %v1698, %v1715
  %v1717 = vsel %vm1703, %v1714, %v1716
  %v1718 = vshll.u32 %v1678, 8
  %v1719 = vmul.u32.u64.compose %v1718, %v1717
  %v1720 = vextract.low.u32 %v1719
  %v1721 = vextract.high.u32 %v1719
  %v1722 = vmul.u32.u64.compose %v1718, %v1713
  %v1723 = vextract.low.u32 %v1722
  %v1724 = vextract.high.u32 %v1722
  %v1725 = vmul.u32 %v1718, %v1709
  %v1726 = vadd.s32 %v1721, %v1723
  %vm1727 = vc.u32 %v1721, %v1723
  %v1728 = vadd.s32 %v1724, 1
  %v1729 = vsel %vm1727, %v1728, %v1724
  %v1730 = vadd.s32 %v1725, %v1729
  %v1731 = vadd.s32 %v1730, 536870912
  %v1732 = vshrl.u32 %v1731, 30
  %v1733 = vshll.u32 %v1732, 30
  %v1734 = vsub.s32 %v1730, %v1733
  %vm1735 = vcmp.lt.s32.totalorder %v1734, 0
  %v1736 = vsub.s32 0, %v1734
  %v1737 = vsel %vm1735, %v1736, %v1734
  %v1738 = vclz %v1737
  %v1739 = vsub.s32 %v1738, 2
  %vm1740 = vcmp.gt.s32.totalorder 0, %v1739
  %v1741 = vsel %vm1740, 0, %v1739
  %v1742 = vsub.s32 32, %v1741
  %v1743 = vshll.u32 %v1734, %v1741
  %v1744 = vshrl.u32 %v1726, %v1742
  %v1745 = vor.u32 %v1743, %v1744
  %v1746 = vsub.s32 4294967266, %v1741
  %v1747 = vadd.s32 %v1746, 127
  %v1748 = vshll.u32 %v1747, 23
  %v1749 = vor.u32 4788187, %v1748
  %v1750 = vand.u32 2147483647, %v1749
  %v1752 = vcvt.s32.f32 %v1745
  %v1753 = vmul.f32 %v1752, %v1750
  %v1754 = vxor.u32 %v1753, 2147483648
  %v1755 = vsel %vm1672, %v1754, %v1753
  %v1756 = vsub.s32 4, %v1732
  %v1757 = vsel %vm1672, %v1756, %v1732
  %v1758 = vsel %vm1671, %v523, %v1755
  %v1759 = vsel %vm1671, 0, %v1757
  %v1760 = vcosq.f32.pop %v1758
  %v1761 = vsinq.f32.pop %v1758
  %vm1762 = vweird.f32 %v523
  %v1763 = vand.u32 %v1759, 3
  %vm1764 = vcmp.lt.s32.totalorder %v1763, 2
  %vm1765 = vcmp.eq.s32.totalorder %v1763, 0
  %v1766 = vxor.u32 %v1761, 2147483648
  %v1767 = vsel %vm1765, %v1760, %v1766
  %vm1768 = vcmp.eq.s32.totalorder %v1763, 2
  %v1769 = vxor.u32 %v1760, 2147483648
  %v1770 = vsel %vm1768, %v1769, %v1761
  %v1771 = vsel %vm1764, %v1767, %v1770
  %v1772 = vsel %vm1762, nan, %v1771
  %v1773 = vand.u32 2147483647, %v524
  %vm1774 = vcmp.le.f32.partialorder %v1773, 0.7853982
  %vm1775 = vcmp.lt.s32.totalorder %v524, 0
  %v1776 = vand.u32 %v524, 2139095040
  %v1777 = vshrl.u32 %v1776, 23
  %v1778 = vsub.s32 %v1777, 127
  %v1779 = vand.u32 2147483647, %v524
  %v1780 = vand.u32 %v1779, 8388607
  %v1781 = vor.u32 %v1780, 8388608
  %v1782 = vsub.s32 0, %v1781
  %v1783 = vadd.s32 %v1778, 1
  %vm1784 = vcmp.gt.s32.totalorder %v1783, 0
  %v1785 = vsel %vm1784, %v1783, 0
  %v1786 = vshrl.u32 %v1785, 5
  %v1787 = vand.u32 %v1785, 31
  %v1788 = vsub.s32 32, %v1787
  %v1789 = vshrl.u32 683565275, %v1788
  %v1790 = vshll.u32 683565275, %v1787
  %v1791 = vshrl.u32 2475754826, %v1788
  %v1792 = vor.u32 %v1790, %v1791
  %v1793 = vshll.u32 2475754826, %v1787
  %v1794 = vshrl.u32 2131351028, %v1788
  %v1795 = vor.u32 %v1793, %v1794
  %v1796 = vshll.u32 2131351028, %v1787
  %v1797 = vshrl.u32 2102212464, %v1788
  %v1798 = vor.u32 %v1796, %v1797
  %v1799 = vshll.u32 2102212464, %v1787
  %v1800 = vshrl.u32 920167782, %v1788
  %v1801 = vor.u32 %v1799, %v1800
  %v1802 = vshll.u32 920167782, %v1787
  %v1803 = vshrl.u32 1326507024, %v1788
  %v1804 = vor.u32 %v1802, %v1803
  %vm1805 = vcmp.lt.s32.totalorder %v1786, 1
  %vm1806 = vcmp.lt.s32.totalorder %v1786, 2
  %vm1807 = vcmp.lt.s32.totalorder %v1786, 3
  %vm1808 = vcmp.lt.s32.totalorder %v1786, 4
  %v1809 = vsel %vm1805, %v1789, %v1792
  %v1810 = vsel %vm1808, %v1798, 2102212464
  %v1811 = vsel %vm1807, %v1795, %v1810
  %v1812 = vsel %vm1806, %v1809, %v1811
  %v1813 = vsel %vm1805, %v1792, %v1795
  %v1814 = vsel %vm1808, %v1801, 920167782
  %v1815 = vsel %vm1807, %v1798, %v1814
  %v1816 = vsel %vm1806, %v1813, %v1815
  %v1817 = vsel %vm1805, %v1795, %v1798
  %v1818 = vsel %vm1808, %v1804, 1326507024
  %v1819 = vsel %vm1807, %v1801, %v1818
  %v1820 = vsel %vm1806, %v1817, %v1819
  %v1821 = vshll.u32 %v1781, 8
  %v1822 = vmul.u32.u64.compose %v1821, %v1820
  %v1823 = vextract.low.u32 %v1822
  %v1824 = vextract.high.u32 %v1822
  %v1825 = vmul.u32.u64.compose %v1821, %v1816
  %v1826 = vextract.low.u32 %v1825
  %v1827 = vextract.high.u32 %v1825
  %v1828 = vmul.u32 %v1821, %v1812
  %v1829 = vadd.s32 %v1824, %v1826
  %vm1830 = vc.u32 %v1824, %v1826
  %v1831 = vadd.s32 %v1827, 1
  %v1832 = vsel %vm1830, %v1831, %v1827
  %v1833 = vadd.s32 %v1828, %v1832
  %v1834 = vadd.s32 %v1833, 536870912
  %v1835 = vshrl.u32 %v1834, 30
  %v1836 = vshll.u32 %v1835, 30
  %v1837 = vsub.s32 %v1833, %v1836
  %vm1838 = vcmp.lt.s32.totalorder %v1837, 0
  %v1839 = vsub.s32 0, %v1837
  %v1840 = vsel %vm1838, %v1839, %v1837
  %v1841 = vclz %v1840
  %v1842 = vsub.s32 %v1841, 2
  %vm1843 = vcmp.gt.s32.totalorder 0, %v1842
  %v1844 = vsel %vm1843, 0, %v1842
  %v1845 = vsub.s32 32, %v1844
  %v1846 = vshll.u32 %v1837, %v1844
  %v1847 = vshrl.u32 %v1829, %v1845
  %v1848 = vor.u32 %v1846, %v1847
  %v1849 = vsub.s32 4294967266, %v1844
  %v1850 = vadd.s32 %v1849, 127
  %v1851 = vshll.u32 %v1850, 23
  %v1852 = vor.u32 4788187, %v1851
  %v1853 = vand.u32 2147483647, %v1852
  %v1855 = vcvt.s32.f32 %v1848
  %v1856 = vmul.f32 %v1855, %v1853
  %v1857 = vxor.u32 %v1856, 2147483648
  %v1858 = vsel %vm1775, %v1857, %v1856
  %v1859 = vsub.s32 4, %v1835
  %v1860 = vsel %vm1775, %v1859, %v1835
  %v1861 = vsel %vm1774, %v524, %v1858
  %v1862 = vsel %vm1774, 0, %v1860
  %v1863 = vcosq.f32.pop %v1861
  %v1864 = vsinq.f32.pop %v1861
  %vm1865 = vweird.f32 %v524
  %v1866 = vand.u32 %v1862, 3
  %vm1867 = vcmp.lt.s32.totalorder %v1866, 2
  %vm1868 = vcmp.eq.s32.totalorder %v1866, 0
  %v1869 = vxor.u32 %v1864, 2147483648
  %v1870 = vsel %vm1868, %v1863, %v1869
  %vm1871 = vcmp.eq.s32.totalorder %v1866, 2
  %v1872 = vxor.u32 %v1863, 2147483648
  %v1873 = vsel %vm1871, %v1872, %v1864
  %v1874 = vsel %vm1867, %v1870, %v1873
  %v1875 = vsel %vm1865, nan, %v1874
  %v1876 = vand.u32 2147483647, %v525
  %vm1877 = vcmp.le.f32.partialorder %v1876, 0.7853982
  %vm1878 = vcmp.lt.s32.totalorder %v525, 0
  %v1879 = vand.u32 %v525, 2139095040
  %v1880 = vshrl.u32 %v1879, 23
  %v1881 = vsub.s32 %v1880, 127
  %v1882 = vand.u32 2147483647, %v525
  %v1883 = vand.u32 %v1882, 8388607
  %v1884 = vor.u32 %v1883, 8388608
  %v1885 = vsub.s32 0, %v1884
  %v1886 = vadd.s32 %v1881, 1
  %vm1887 = vcmp.gt.s32.totalorder %v1886, 0
  %v1888 = vsel %vm1887, %v1886, 0
  %v1889 = vshrl.u32 %v1888, 5
  %v1890 = vand.u32 %v1888, 31
  %v1891 = vsub.s32 32, %v1890
  %v1892 = vshrl.u32 683565275, %v1891
  %v1893 = vshll.u32 683565275, %v1890
  %v1894 = vshrl.u32 2475754826, %v1891
  %v1895 = vor.u32 %v1893, %v1894
  %v1896 = vshll.u32 2475754826, %v1890
  %v1897 = vshrl.u32 2131351028, %v1891
  %v1898 = vor.u32 %v1896, %v1897
  %v1899 = vshll.u32 2131351028, %v1890
  %v1900 = vshrl.u32 2102212464, %v1891
  %v1901 = vor.u32 %v1899, %v1900
  %v1902 = vshll.u32 2102212464, %v1890
  %v1903 = vshrl.u32 920167782, %v1891
  %v1904 = vor.u32 %v1902, %v1903
  %v1905 = vshll.u32 920167782, %v1890
  %v1906 = vshrl.u32 1326507024, %v1891
  %v1907 = vor.u32 %v1905, %v1906
  %vm1908 = vcmp.lt.s32.totalorder %v1889, 1
  %vm1909 = vcmp.lt.s32.totalorder %v1889, 2
  %vm1910 = vcmp.lt.s32.totalorder %v1889, 3
  %vm1911 = vcmp.lt.s32.totalorder %v1889, 4
  %v1912 = vsel %vm1908, %v1892, %v1895
  %v1913 = vsel %vm1911, %v1901, 2102212464
  %v1914 = vsel %vm1910, %v1898, %v1913
  %v1915 = vsel %vm1909, %v1912, %v1914
  %v1916 = vsel %vm1908, %v1895, %v1898
  %v1917 = vsel %vm1911, %v1904, 920167782
  %v1918 = vsel %vm1910, %v1901, %v1917
  %v1919 = vsel %vm1909, %v1916, %v1918
  %v1920 = vsel %vm1908, %v1898, %v1901
  %v1921 = vsel %vm1911, %v1907, 1326507024
  %v1922 = vsel %vm1910, %v1904, %v1921
  %v1923 = vsel %vm1909, %v1920, %v1922
  %v1924 = vshll.u32 %v1884, 8
  %v1925 = vmul.u32.u64.compose %v1924, %v1923
  %v1926 = vextract.low.u32 %v1925
  %v1927 = vextract.high.u32 %v1925
  %v1928 = vmul.u32.u64.compose %v1924, %v1919
  %v1929 = vextract.low.u32 %v1928
  %v1930 = vextract.high.u32 %v1928
  %v1931 = vmul.u32 %v1924, %v1915
  %v1932 = vadd.s32 %v1927, %v1929
  %vm1933 = vc.u32 %v1927, %v1929
  %v1934 = vadd.s32 %v1930, 1
  %v1935 = vsel %vm1933, %v1934, %v1930
  %v1936 = vadd.s32 %v1931, %v1935
  %v1937 = vadd.s32 %v1936, 536870912
  %v1938 = vshrl.u32 %v1937, 30
  %v1939 = vshll.u32 %v1938, 30
  %v1940 = vsub.s32 %v1936, %v1939
  %vm1941 = vcmp.lt.s32.totalorder %v1940, 0
  %v1942 = vsub.s32 0, %v1940
  %v1943 = vsel %vm1941, %v1942, %v1940
  %v1944 = vclz %v1943
  %v1945 = vsub.s32 %v1944, 2
  %vm1946 = vcmp.gt.s32.totalorder 0, %v1945
  %v1947 = vsel %vm1946, 0, %v1945
  %v1948 = vsub.s32 32, %v1947
  %v1949 = vshll.u32 %v1940, %v1947
  %v1950 = vshrl.u32 %v1932, %v1948
  %v1951 = vor.u32 %v1949, %v1950
  %v1952 = vsub.s32 4294967266, %v1947
  %v1953 = vadd.s32 %v1952, 127
  %v1954 = vshll.u32 %v1953, 23
  %v1955 = vor.u32 4788187, %v1954
  %v1956 = vand.u32 2147483647, %v1955
  %v1958 = vcvt.s32.f32 %v1951
  %v1959 = vmul.f32 %v1958, %v1956
  %v1960 = vxor.u32 %v1959, 2147483648
  %v1961 = vsel %vm1878, %v1960, %v1959
  %v1962 = vsub.s32 4, %v1938
  %v1963 = vsel %vm1878, %v1962, %v1938
  %v1964 = vsel %vm1877, %v525, %v1961
  %v1965 = vsel %vm1877, 0, %v1963
  %v1966 = vcosq.f32.pop %v1964
  %v1967 = vsinq.f32.pop %v1964
  %vm1968 = vweird.f32 %v525
  %v1969 = vand.u32 %v1965, 3
  %vm1970 = vcmp.lt.s32.totalorder %v1969, 2
  %vm1971 = vcmp.eq.s32.totalorder %v1969, 0
  %v1972 = vxor.u32 %v1967, 2147483648
  %v1973 = vsel %vm1971, %v1966, %v1972
  %vm1974 = vcmp.eq.s32.totalorder %v1969, 2
  %v1975 = vxor.u32 %v1966, 2147483648
  %v1976 = vsel %vm1974, %v1975, %v1967
  %v1977 = vsel %vm1970, %v1973, %v1976
  %v1978 = vsel %vm1968, nan, %v1977
  %v1979 = vand.u32 2147483647, %v526
  %vm1980 = vcmp.le.f32.partialorder %v1979, 0.7853982
  %vm1981 = vcmp.lt.s32.totalorder %v526, 0
  %v1982 = vand.u32 %v526, 2139095040
  %v1983 = vshrl.u32 %v1982, 23
  %v1984 = vsub.s32 %v1983, 127
  %v1985 = vand.u32 2147483647, %v526
  %v1986 = vand.u32 %v1985, 8388607
  %v1987 = vor.u32 %v1986, 8388608
  %v1988 = vsub.s32 0, %v1987
  %v1989 = vadd.s32 %v1984, 1
  %vm1990 = vcmp.gt.s32.totalorder %v1989, 0
  %v1991 = vsel %vm1990, %v1989, 0
  %v1992 = vshrl.u32 %v1991, 5
  %v1993 = vand.u32 %v1991, 31
  %v1994 = vsub.s32 32, %v1993
  %v1995 = vshrl.u32 683565275, %v1994
  %v1996 = vshll.u32 683565275, %v1993
  %v1997 = vshrl.u32 2475754826, %v1994
  %v1998 = vor.u32 %v1996, %v1997
  %v1999 = vshll.u32 2475754826, %v1993
  %v2000 = vshrl.u32 2131351028, %v1994
  %v2001 = vor.u32 %v1999, %v2000
  %v2002 = vshll.u32 2131351028, %v1993
  %v2003 = vshrl.u32 2102212464, %v1994
  %v2004 = vor.u32 %v2002, %v2003
  %v2005 = vshll.u32 2102212464, %v1993
  %v2006 = vshrl.u32 920167782, %v1994
  %v2007 = vor.u32 %v2005, %v2006
  %v2008 = vshll.u32 920167782, %v1993
  %v2009 = vshrl.u32 1326507024, %v1994
  %v2010 = vor.u32 %v2008, %v2009
  %vm2011 = vcmp.lt.s32.totalorder %v1992, 1
  %vm2012 = vcmp.lt.s32.totalorder %v1992, 2
  %vm2013 = vcmp.lt.s32.totalorder %v1992, 3
  %vm2014 = vcmp.lt.s32.totalorder %v1992, 4
  %v2015 = vsel %vm2011, %v1995, %v1998
  %v2016 = vsel %vm2014, %v2004, 2102212464
  %v2017 = vsel %vm2013, %v2001, %v2016
  %v2018 = vsel %vm2012, %v2015, %v2017
  %v2019 = vsel %vm2011, %v1998, %v2001
  %v2020 = vsel %vm2014, %v2007, 920167782
  %v2021 = vsel %vm2013, %v2004, %v2020
  %v2022 = vsel %vm2012, %v2019, %v2021
  %v2023 = vsel %vm2011, %v2001, %v2004
  %v2024 = vsel %vm2014, %v2010, 1326507024
  %v2025 = vsel %vm2013, %v2007, %v2024
  %v2026 = vsel %vm2012, %v2023, %v2025
  %v2027 = vshll.u32 %v1987, 8
  %v2028 = vmul.u32.u64.compose %v2027, %v2026
  %v2029 = vextract.low.u32 %v2028
  %v2030 = vextract.high.u32 %v2028
  %v2031 = vmul.u32.u64.compose %v2027, %v2022
  %v2032 = vextract.low.u32 %v2031
  %v2033 = vextract.high.u32 %v2031
  %v2034 = vmul.u32 %v2027, %v2018
  %v2035 = vadd.s32 %v2030, %v2032
  %vm2036 = vc.u32 %v2030, %v2032
  %v2037 = vadd.s32 %v2033, 1
  %v2038 = vsel %vm2036, %v2037, %v2033
  %v2039 = vadd.s32 %v2034, %v2038
  %v2040 = vadd.s32 %v2039, 536870912
  %v2041 = vshrl.u32 %v2040, 30
  %v2042 = vshll.u32 %v2041, 30
  %v2043 = vsub.s32 %v2039, %v2042
  %vm2044 = vcmp.lt.s32.totalorder %v2043, 0
  %v2045 = vsub.s32 0, %v2043
  %v2046 = vsel %vm2044, %v2045, %v2043
  %v2047 = vclz %v2046
  %v2048 = vsub.s32 %v2047, 2
  %vm2049 = vcmp.gt.s32.totalorder 0, %v2048
  %v2050 = vsel %vm2049, 0, %v2048
  %v2051 = vsub.s32 32, %v2050
  %v2052 = vshll.u32 %v2043, %v2050
  %v2053 = vshrl.u32 %v2035, %v2051
  %v2054 = vor.u32 %v2052, %v2053
  %v2055 = vsub.s32 4294967266, %v2050
  %v2056 = vadd.s32 %v2055, 127
  %v2057 = vshll.u32 %v2056, 23
  %v2058 = vor.u32 4788187, %v2057
  %v2059 = vand.u32 2147483647, %v2058
  %v2061 = vcvt.s32.f32 %v2054
  %v2062 = vmul.f32 %v2061, %v2059
  %v2063 = vxor.u32 %v2062, 2147483648
  %v2064 = vsel %vm1981, %v2063, %v2062
  %v2065 = vsub.s32 4, %v2041
  %v2066 = vsel %vm1981, %v2065, %v2041
  %v2067 = vsel %vm1980, %v526, %v2064
  %v2068 = vsel %vm1980, 0, %v2066
  %v2069 = vcosq.f32.pop %v2067
  %v2070 = vsinq.f32.pop %v2067
  %vm2071 = vweird.f32 %v526
  %v2072 = vand.u32 %v2068, 3
  %vm2073 = vcmp.lt.s32.totalorder %v2072, 2
  %vm2074 = vcmp.eq.s32.totalorder %v2072, 0
  %v2075 = vxor.u32 %v2070, 2147483648
  %v2076 = vsel %vm2074, %v2069, %v2075
  %vm2077 = vcmp.eq.s32.totalorder %v2072, 2
  %v2078 = vxor.u32 %v2069, 2147483648
  %v2079 = vsel %vm2077, %v2078, %v2070
  %v2080 = vsel %vm2073, %v2076, %v2079
  %v2081 = vsel %vm2071, nan, %v2080
  %v2082 = vand.u32 2147483647, %v527
  %vm2083 = vcmp.le.f32.partialorder %v2082, 0.7853982
  %vm2084 = vcmp.lt.s32.totalorder %v527, 0
  %v2085 = vand.u32 %v527, 2139095040
  %v2086 = vshrl.u32 %v2085, 23
  %v2087 = vsub.s32 %v2086, 127
  %v2088 = vand.u32 2147483647, %v527
  %v2089 = vand.u32 %v2088, 8388607
  %v2090 = vor.u32 %v2089, 8388608
  %v2091 = vsub.s32 0, %v2090
  %v2092 = vadd.s32 %v2087, 1
  %vm2093 = vcmp.gt.s32.totalorder %v2092, 0
  %v2094 = vsel %vm2093, %v2092, 0
  %v2095 = vshrl.u32 %v2094, 5
  %v2096 = vand.u32 %v2094, 31
  %v2097 = vsub.s32 32, %v2096
  %v2098 = vshrl.u32 683565275, %v2097
  %v2099 = vshll.u32 683565275, %v2096
  %v2100 = vshrl.u32 2475754826, %v2097
  %v2101 = vor.u32 %v2099, %v2100
  %v2102 = vshll.u32 2475754826, %v2096
  %v2103 = vshrl.u32 2131351028, %v2097
  %v2104 = vor.u32 %v2102, %v2103
  %v2105 = vshll.u32 2131351028, %v2096
  %v2106 = vshrl.u32 2102212464, %v2097
  %v2107 = vor.u32 %v2105, %v2106
  %v2108 = vshll.u32 2102212464, %v2096
  %v2109 = vshrl.u32 920167782, %v2097
  %v2110 = vor.u32 %v2108, %v2109
  %v2111 = vshll.u32 920167782, %v2096
  %v2112 = vshrl.u32 1326507024, %v2097
  %v2113 = vor.u32 %v2111, %v2112
  %vm2114 = vcmp.lt.s32.totalorder %v2095, 1
  %vm2115 = vcmp.lt.s32.totalorder %v2095, 2
  %vm2116 = vcmp.lt.s32.totalorder %v2095, 3
  %vm2117 = vcmp.lt.s32.totalorder %v2095, 4
  %v2118 = vsel %vm2114, %v2098, %v2101
  %v2119 = vsel %vm2117, %v2107, 2102212464
  %v2120 = vsel %vm2116, %v2104, %v2119
  %v2121 = vsel %vm2115, %v2118, %v2120
  %v2122 = vsel %vm2114, %v2101, %v2104
  %v2123 = vsel %vm2117, %v2110, 920167782
  %v2124 = vsel %vm2116, %v2107, %v2123
  %v2125 = vsel %vm2115, %v2122, %v2124
  %v2126 = vsel %vm2114, %v2104, %v2107
  %v2127 = vsel %vm2117, %v2113, 1326507024
  %v2128 = vsel %vm2116, %v2110, %v2127
  %v2129 = vsel %vm2115, %v2126, %v2128
  %v2130 = vshll.u32 %v2090, 8
  %v2131 = vmul.u32.u64.compose %v2130, %v2129
  %v2132 = vextract.low.u32 %v2131
  %v2133 = vextract.high.u32 %v2131
  %v2134 = vmul.u32.u64.compose %v2130, %v2125
  %v2135 = vextract.low.u32 %v2134
  %v2136 = vextract.high.u32 %v2134
  %v2137 = vmul.u32 %v2130, %v2121
  %v2138 = vadd.s32 %v2133, %v2135
  %vm2139 = vc.u32 %v2133, %v2135
  %v2140 = vadd.s32 %v2136, 1
  %v2141 = vsel %vm2139, %v2140, %v2136
  %v2142 = vadd.s32 %v2137, %v2141
  %v2143 = vadd.s32 %v2142, 536870912
  %v2144 = vshrl.u32 %v2143, 30
  %v2145 = vshll.u32 %v2144, 30
  %v2146 = vsub.s32 %v2142, %v2145
  %vm2147 = vcmp.lt.s32.totalorder %v2146, 0
  %v2148 = vsub.s32 0, %v2146
  %v2149 = vsel %vm2147, %v2148, %v2146
  %v2150 = vclz %v2149
  %v2151 = vsub.s32 %v2150, 2
  %vm2152 = vcmp.gt.s32.totalorder 0, %v2151
  %v2153 = vsel %vm2152, 0, %v2151
  %v2154 = vsub.s32 32, %v2153
  %v2155 = vshll.u32 %v2146, %v2153
  %v2156 = vshrl.u32 %v2138, %v2154
  %v2157 = vor.u32 %v2155, %v2156
  %v2158 = vsub.s32 4294967266, %v2153
  %v2159 = vadd.s32 %v2158, 127
  %v2160 = vshll.u32 %v2159, 23
  %v2161 = vor.u32 4788187, %v2160
  %v2162 = vand.u32 2147483647, %v2161
  %v2164 = vcvt.s32.f32 %v2157
  %v2165 = vmul.f32 %v2164, %v2162
  %v2166 = vxor.u32 %v2165, 2147483648
  %v2167 = vsel %vm2084, %v2166, %v2165
  %v2168 = vsub.s32 4, %v2144
  %v2169 = vsel %vm2084, %v2168, %v2144
  %v2170 = vsel %vm2083, %v527, %v2167
  %v2171 = vsel %vm2083, 0, %v2169
  %v2172 = vcosq.f32.pop %v2170
  %v2173 = vsinq.f32.pop %v2170
  %vm2174 = vweird.f32 %v527
  %v2175 = vand.u32 %v2171, 3
  %vm2176 = vcmp.lt.s32.totalorder %v2175, 2
  %vm2177 = vcmp.eq.s32.totalorder %v2175, 0
  %v2178 = vxor.u32 %v2173, 2147483648
  %v2179 = vsel %vm2177, %v2172, %v2178
  %vm2180 = vcmp.eq.s32.totalorder %v2175, 2
  %v2181 = vxor.u32 %v2172, 2147483648
  %v2182 = vsel %vm2180, %v2181, %v2173
  %v2183 = vsel %vm2176, %v2179, %v2182
  %v2184 = vsel %vm2174, nan, %v2183
  %v2185 = vand.u32 2147483647, %v528
  %vm2186 = vcmp.le.f32.partialorder %v2185, 0.7853982
  %vm2187 = vcmp.lt.s32.totalorder %v528, 0
  %v2188 = vand.u32 %v528, 2139095040
  %v2189 = vshrl.u32 %v2188, 23
  %v2190 = vsub.s32 %v2189, 127
  %v2191 = vand.u32 2147483647, %v528
  %v2192 = vand.u32 %v2191, 8388607
  %v2193 = vor.u32 %v2192, 8388608
  %v2194 = vsub.s32 0, %v2193
  %v2195 = vadd.s32 %v2190, 1
  %vm2196 = vcmp.gt.s32.totalorder %v2195, 0
  %v2197 = vsel %vm2196, %v2195, 0
  %v2198 = vshrl.u32 %v2197, 5
  %v2199 = vand.u32 %v2197, 31
  %v2200 = vsub.s32 32, %v2199
  %v2201 = vshrl.u32 683565275, %v2200
  %v2202 = vshll.u32 683565275, %v2199
  %v2203 = vshrl.u32 2475754826, %v2200
  %v2204 = vor.u32 %v2202, %v2203
  %v2205 = vshll.u32 2475754826, %v2199
  %v2206 = vshrl.u32 2131351028, %v2200
  %v2207 = vor.u32 %v2205, %v2206
  %v2208 = vshll.u32 2131351028, %v2199
  %v2209 = vshrl.u32 2102212464, %v2200
  %v2210 = vor.u32 %v2208, %v2209
  %v2211 = vshll.u32 2102212464, %v2199
  %v2212 = vshrl.u32 920167782, %v2200
  %v2213 = vor.u32 %v2211, %v2212
  %v2214 = vshll.u32 920167782, %v2199
  %v2215 = vshrl.u32 1326507024, %v2200
  %v2216 = vor.u32 %v2214, %v2215
  %vm2217 = vcmp.lt.s32.totalorder %v2198, 1
  %vm2218 = vcmp.lt.s32.totalorder %v2198, 2
  %vm2219 = vcmp.lt.s32.totalorder %v2198, 3
  %vm2220 = vcmp.lt.s32.totalorder %v2198, 4
  %v2221 = vsel %vm2217, %v2201, %v2204
  %v2222 = vsel %vm2220, %v2210, 2102212464
  %v2223 = vsel %vm2219, %v2207, %v2222
  %v2224 = vsel %vm2218, %v2221, %v2223
  %v2225 = vsel %vm2217, %v2204, %v2207
  %v2226 = vsel %vm2220, %v2213, 920167782
  %v2227 = vsel %vm2219, %v2210, %v2226
  %v2228 = vsel %vm2218, %v2225, %v2227
  %v2229 = vsel %vm2217, %v2207, %v2210
  %v2230 = vsel %vm2220, %v2216, 1326507024
  %v2231 = vsel %vm2219, %v2213, %v2230
  %v2232 = vsel %vm2218, %v2229, %v2231
  %v2233 = vshll.u32 %v2193, 8
  %v2234 = vmul.u32.u64.compose %v2233, %v2232
  %v2235 = vextract.low.u32 %v2234
  %v2236 = vextract.high.u32 %v2234
  %v2237 = vmul.u32.u64.compose %v2233, %v2228
  %v2238 = vextract.low.u32 %v2237
  %v2239 = vextract.high.u32 %v2237
  %v2240 = vmul.u32 %v2233, %v2224
  %v2241 = vadd.s32 %v2236, %v2238
  %vm2242 = vc.u32 %v2236, %v2238
  %v2243 = vadd.s32 %v2239, 1
  %v2244 = vsel %vm2242, %v2243, %v2239
  %v2245 = vadd.s32 %v2240, %v2244
  %v2246 = vadd.s32 %v2245, 536870912
  %v2247 = vshrl.u32 %v2246, 30
  %v2248 = vshll.u32 %v2247, 30
  %v2249 = vsub.s32 %v2245, %v2248
  %vm2250 = vcmp.lt.s32.totalorder %v2249, 0
  %v2251 = vsub.s32 0, %v2249
  %v2252 = vsel %vm2250, %v2251, %v2249
  %v2253 = vclz %v2252
  %v2254 = vsub.s32 %v2253, 2
  %vm2255 = vcmp.gt.s32.totalorder 0, %v2254
  %v2256 = vsel %vm2255, 0, %v2254
  %v2257 = vsub.s32 32, %v2256
  %v2258 = vshll.u32 %v2249, %v2256
  %v2259 = vshrl.u32 %v2241, %v2257
  %v2260 = vor.u32 %v2258, %v2259
  %v2261 = vsub.s32 4294967266, %v2256
  %v2262 = vadd.s32 %v2261, 127
  %v2263 = vshll.u32 %v2262, 23
  %v2264 = vor.u32 4788187, %v2263
  %v2265 = vand.u32 2147483647, %v2264
  %v2267 = vcvt.s32.f32 %v2260
  %v2268 = vmul.f32 %v2267, %v2265
  %v2269 = vxor.u32 %v2268, 2147483648
  %v2270 = vsel %vm2187, %v2269, %v2268
  %v2271 = vsub.s32 4, %v2247
  %v2272 = vsel %vm2187, %v2271, %v2247
  %v2273 = vsel %vm2186, %v528, %v2270
  %v2274 = vsel %vm2186, 0, %v2272
  %v2275 = vcosq.f32.pop %v2273
  %v2276 = vsinq.f32.pop %v2273
  %vm2277 = vweird.f32 %v528
  %v2278 = vand.u32 %v2274, 3
  %vm2279 = vcmp.lt.s32.totalorder %v2278, 2
  %vm2280 = vcmp.eq.s32.totalorder %v2278, 0
  %v2281 = vxor.u32 %v2276, 2147483648
  %v2282 = vsel %vm2280, %v2275, %v2281
  %vm2283 = vcmp.eq.s32.totalorder %v2278, 2
  %v2284 = vxor.u32 %v2275, 2147483648
  %v2285 = vsel %vm2283, %v2284, %v2276
  %v2286 = vsel %vm2279, %v2282, %v2285
  %v2287 = vsel %vm2277, nan, %v2286
  %v2288 = vand.u32 2147483647, %v529
  %vm2289 = vcmp.le.f32.partialorder %v2288, 0.7853982
  %vm2290 = vcmp.lt.s32.totalorder %v529, 0
  %v2291 = vand.u32 %v529, 2139095040
  %v2292 = vshrl.u32 %v2291, 23
  %v2293 = vsub.s32 %v2292, 127
  %v2294 = vand.u32 2147483647, %v529
  %v2295 = vand.u32 %v2294, 8388607
  %v2296 = vor.u32 %v2295, 8388608
  %v2297 = vsub.s32 0, %v2296
  %v2298 = vadd.s32 %v2293, 1
  %vm2299 = vcmp.gt.s32.totalorder %v2298, 0
  %v2300 = vsel %vm2299, %v2298, 0
  %v2301 = vshrl.u32 %v2300, 5
  %v2302 = vand.u32 %v2300, 31
  %v2303 = vsub.s32 32, %v2302
  %v2304 = vshrl.u32 683565275, %v2303
  %v2305 = vshll.u32 683565275, %v2302
  %v2306 = vshrl.u32 2475754826, %v2303
  %v2307 = vor.u32 %v2305, %v2306
  %v2308 = vshll.u32 2475754826, %v2302
  %v2309 = vshrl.u32 2131351028, %v2303
  %v2310 = vor.u32 %v2308, %v2309
  %v2311 = vshll.u32 2131351028, %v2302
  %v2312 = vshrl.u32 2102212464, %v2303
  %v2313 = vor.u32 %v2311, %v2312
  %v2314 = vshll.u32 2102212464, %v2302
  %v2315 = vshrl.u32 920167782, %v2303
  %v2316 = vor.u32 %v2314, %v2315
  %v2317 = vshll.u32 920167782, %v2302
  %v2318 = vshrl.u32 1326507024, %v2303
  %v2319 = vor.u32 %v2317, %v2318
  %vm2320 = vcmp.lt.s32.totalorder %v2301, 1
  %vm2321 = vcmp.lt.s32.totalorder %v2301, 2
  %vm2322 = vcmp.lt.s32.totalorder %v2301, 3
  %vm2323 = vcmp.lt.s32.totalorder %v2301, 4
  %v2324 = vsel %vm2320, %v2304, %v2307
  %v2325 = vsel %vm2323, %v2313, 2102212464
  %v2326 = vsel %vm2322, %v2310, %v2325
  %v2327 = vsel %vm2321, %v2324, %v2326
  %v2328 = vsel %vm2320, %v2307, %v2310
  %v2329 = vsel %vm2323, %v2316, 920167782
  %v2330 = vsel %vm2322, %v2313, %v2329
  %v2331 = vsel %vm2321, %v2328, %v2330
  %v2332 = vsel %vm2320, %v2310, %v2313
  %v2333 = vsel %vm2323, %v2319, 1326507024
  %v2334 = vsel %vm2322, %v2316, %v2333
  %v2335 = vsel %vm2321, %v2332, %v2334
  %v2336 = vshll.u32 %v2296, 8
  %v2337 = vmul.u32.u64.compose %v2336, %v2335
  %v2338 = vextract.low.u32 %v2337
  %v2339 = vextract.high.u32 %v2337
  %v2340 = vmul.u32.u64.compose %v2336, %v2331
  %v2341 = vextract.low.u32 %v2340
  %v2342 = vextract.high.u32 %v2340
  %v2343 = vmul.u32 %v2336, %v2327
  %v2344 = vadd.s32 %v2339, %v2341
  %vm2345 = vc.u32 %v2339, %v2341
  %v2346 = vadd.s32 %v2342, 1
  %v2347 = vsel %vm2345, %v2346, %v2342
  %v2348 = vadd.s32 %v2343, %v2347
  %v2349 = vadd.s32 %v2348, 536870912
  %v2350 = vshrl.u32 %v2349, 30
  %v2351 = vshll.u32 %v2350, 30
  %v2352 = vsub.s32 %v2348, %v2351
  %vm2353 = vcmp.lt.s32.totalorder %v2352, 0
  %v2354 = vsub.s32 0, %v2352
  %v2355 = vsel %vm2353, %v2354, %v2352
  %v2356 = vclz %v2355
  %v2357 = vsub.s32 %v2356, 2
  %vm2358 = vcmp.gt.s32.totalorder 0, %v2357
  %v2359 = vsel %vm2358, 0, %v2357
  %v2360 = vsub.s32 32, %v2359
  %v2361 = vshll.u32 %v2352, %v2359
  %v2362 = vshrl.u32 %v2344, %v2360
  %v2363 = vor.u32 %v2361, %v2362
  %v2364 = vsub.s32 4294967266, %v2359
  %v2365 = vadd.s32 %v2364, 127
  %v2366 = vshll.u32 %v2365, 23
  %v2367 = vor.u32 4788187, %v2366
  %v2368 = vand.u32 2147483647, %v2367
  %v2370 = vcvt.s32.f32 %v2363
  %v2371 = vmul.f32 %v2370, %v2368
  %v2372 = vxor.u32 %v2371, 2147483648
  %v2373 = vsel %vm2290, %v2372, %v2371
  %v2374 = vsub.s32 4, %v2350
  %v2375 = vsel %vm2290, %v2374, %v2350
  %v2376 = vsel %vm2289, %v529, %v2373
  %v2377 = vsel %vm2289, 0, %v2375
  %v2378 = vcosq.f32.pop %v2376
  %v2379 = vsinq.f32.pop %v2376
  %vm2380 = vweird.f32 %v529
  %v2381 = vand.u32 %v2377, 3
  %vm2382 = vcmp.lt.s32.totalorder %v2381, 2
  %vm2383 = vcmp.eq.s32.totalorder %v2381, 0
  %v2384 = vxor.u32 %v2379, 2147483648
  %v2385 = vsel %vm2383, %v2378, %v2384
  %vm2386 = vcmp.eq.s32.totalorder %v2381, 2
  %v2387 = vxor.u32 %v2378, 2147483648
  %v2388 = vsel %vm2386, %v2387, %v2379
  %v2389 = vsel %vm2382, %v2385, %v2388
  %v2390 = vsel %vm2380, nan, %v2389
  %v2391 = vand.u32 2147483647, %v530
  %vm2392 = vcmp.le.f32.partialorder %v2391, 0.7853982
  %vm2393 = vcmp.lt.s32.totalorder %v530, 0
  %v2394 = vand.u32 %v530, 2139095040
  %v2395 = vshrl.u32 %v2394, 23
  %v2396 = vsub.s32 %v2395, 127
  %v2397 = vand.u32 2147483647, %v530
  %v2398 = vand.u32 %v2397, 8388607
  %v2399 = vor.u32 %v2398, 8388608
  %v2400 = vsub.s32 0, %v2399
  %v2401 = vadd.s32 %v2396, 1
  %vm2402 = vcmp.gt.s32.totalorder %v2401, 0
  %v2403 = vsel %vm2402, %v2401, 0
  %v2404 = vshrl.u32 %v2403, 5
  %v2405 = vand.u32 %v2403, 31
  %v2406 = vsub.s32 32, %v2405
  %v2407 = vshrl.u32 683565275, %v2406
  %v2408 = vshll.u32 683565275, %v2405
  %v2409 = vshrl.u32 2475754826, %v2406
  %v2410 = vor.u32 %v2408, %v2409
  %v2411 = vshll.u32 2475754826, %v2405
  %v2412 = vshrl.u32 2131351028, %v2406
  %v2413 = vor.u32 %v2411, %v2412
  %v2414 = vshll.u32 2131351028, %v2405
  %v2415 = vshrl.u32 2102212464, %v2406
  %v2416 = vor.u32 %v2414, %v2415
  %v2417 = vshll.u32 2102212464, %v2405
  %v2418 = vshrl.u32 920167782, %v2406
  %v2419 = vor.u32 %v2417, %v2418
  %v2420 = vshll.u32 920167782, %v2405
  %v2421 = vshrl.u32 1326507024, %v2406
  %v2422 = vor.u32 %v2420, %v2421
  %vm2423 = vcmp.lt.s32.totalorder %v2404, 1
  %vm2424 = vcmp.lt.s32.totalorder %v2404, 2
  %vm2425 = vcmp.lt.s32.totalorder %v2404, 3
  %vm2426 = vcmp.lt.s32.totalorder %v2404, 4
  %v2427 = vsel %vm2423, %v2407, %v2410
  %v2428 = vsel %vm2426, %v2416, 2102212464
  %v2429 = vsel %vm2425, %v2413, %v2428
  %v2430 = vsel %vm2424, %v2427, %v2429
  %v2431 = vsel %vm2423, %v2410, %v2413
  %v2432 = vsel %vm2426, %v2419, 920167782
  %v2433 = vsel %vm2425, %v2416, %v2432
  %v2434 = vsel %vm2424, %v2431, %v2433
  %v2435 = vsel %vm2423, %v2413, %v2416
  %v2436 = vsel %vm2426, %v2422, 1326507024
  %v2437 = vsel %vm2425, %v2419, %v2436
  %v2438 = vsel %vm2424, %v2435, %v2437
  %v2439 = vshll.u32 %v2399, 8
  %v2440 = vmul.u32.u64.compose %v2439, %v2438
  %v2441 = vextract.low.u32 %v2440
  %v2442 = vextract.high.u32 %v2440
  %v2443 = vmul.u32.u64.compose %v2439, %v2434
  %v2444 = vextract.low.u32 %v2443
  %v2445 = vextract.high.u32 %v2443
  %v2446 = vmul.u32 %v2439, %v2430
  %v2447 = vadd.s32 %v2442, %v2444
  %vm2448 = vc.u32 %v2442, %v2444
  %v2449 = vadd.s32 %v2445, 1
  %v2450 = vsel %vm2448, %v2449, %v2445
  %v2451 = vadd.s32 %v2446, %v2450
  %v2452 = vadd.s32 %v2451, 536870912
  %v2453 = vshrl.u32 %v2452, 30
  %v2454 = vshll.u32 %v2453, 30
  %v2455 = vsub.s32 %v2451, %v2454
  %vm2456 = vcmp.lt.s32.totalorder %v2455, 0
  %v2457 = vsub.s32 0, %v2455
  %v2458 = vsel %vm2456, %v2457, %v2455
  %v2459 = vclz %v2458
  %v2460 = vsub.s32 %v2459, 2
  %vm2461 = vcmp.gt.s32.totalorder 0, %v2460
  %v2462 = vsel %vm2461, 0, %v2460
  %v2463 = vsub.s32 32, %v2462
  %v2464 = vshll.u32 %v2455, %v2462
  %v2465 = vshrl.u32 %v2447, %v2463
  %v2466 = vor.u32 %v2464, %v2465
  %v2467 = vsub.s32 4294967266, %v2462
  %v2468 = vadd.s32 %v2467, 127
  %v2469 = vshll.u32 %v2468, 23
  %v2470 = vor.u32 4788187, %v2469
  %v2471 = vand.u32 2147483647, %v2470
  %v2473 = vcvt.s32.f32 %v2466
  %v2474 = vmul.f32 %v2473, %v2471
  %v2475 = vxor.u32 %v2474, 2147483648
  %v2476 = vsel %vm2393, %v2475, %v2474
  %v2477 = vsub.s32 4, %v2453
  %v2478 = vsel %vm2393, %v2477, %v2453
  %v2479 = vsel %vm2392, %v530, %v2476
  %v2480 = vsel %vm2392, 0, %v2478
  %v2481 = vcosq.f32.pop %v2479
  %v2482 = vsinq.f32.pop %v2479
  %vm2483 = vweird.f32 %v530
  %v2484 = vand.u32 %v2480, 3
  %vm2485 = vcmp.lt.s32.totalorder %v2484, 2
  %vm2486 = vcmp.eq.s32.totalorder %v2484, 0
  %v2487 = vxor.u32 %v2482, 2147483648
  %v2488 = vsel %vm2486, %v2481, %v2487
  %vm2489 = vcmp.eq.s32.totalorder %v2484, 2
  %v2490 = vxor.u32 %v2481, 2147483648
  %v2491 = vsel %vm2489, %v2490, %v2482
  %v2492 = vsel %vm2485, %v2488, %v2491
  %v2493 = vsel %vm2483, nan, %v2492
  %v2494 = vand.u32 2147483647, %v531
  %vm2495 = vcmp.le.f32.partialorder %v2494, 0.7853982
  %vm2496 = vcmp.lt.s32.totalorder %v531, 0
  %v2497 = vand.u32 %v531, 2139095040
  %v2498 = vshrl.u32 %v2497, 23
  %v2499 = vsub.s32 %v2498, 127
  %v2500 = vand.u32 2147483647, %v531
  %v2501 = vand.u32 %v2500, 8388607
  %v2502 = vor.u32 %v2501, 8388608
  %v2503 = vsub.s32 0, %v2502
  %v2504 = vadd.s32 %v2499, 1
  %vm2505 = vcmp.gt.s32.totalorder %v2504, 0
  %v2506 = vsel %vm2505, %v2504, 0
  %v2507 = vshrl.u32 %v2506, 5
  %v2508 = vand.u32 %v2506, 31
  %v2509 = vsub.s32 32, %v2508
  %v2510 = vshrl.u32 683565275, %v2509
  %v2511 = vshll.u32 683565275, %v2508
  %v2512 = vshrl.u32 2475754826, %v2509
  %v2513 = vor.u32 %v2511, %v2512
  %v2514 = vshll.u32 2475754826, %v2508
  %v2515 = vshrl.u32 2131351028, %v2509
  %v2516 = vor.u32 %v2514, %v2515
  %v2517 = vshll.u32 2131351028, %v2508
  %v2518 = vshrl.u32 2102212464, %v2509
  %v2519 = vor.u32 %v2517, %v2518
  %v2520 = vshll.u32 2102212464, %v2508
  %v2521 = vshrl.u32 920167782, %v2509
  %v2522 = vor.u32 %v2520, %v2521
  %v2523 = vshll.u32 920167782, %v2508
  %v2524 = vshrl.u32 1326507024, %v2509
  %v2525 = vor.u32 %v2523, %v2524
  %vm2526 = vcmp.lt.s32.totalorder %v2507, 1
  %vm2527 = vcmp.lt.s32.totalorder %v2507, 2
  %vm2528 = vcmp.lt.s32.totalorder %v2507, 3
  %vm2529 = vcmp.lt.s32.totalorder %v2507, 4
  %v2530 = vsel %vm2526, %v2510, %v2513
  %v2531 = vsel %vm2529, %v2519, 2102212464
  %v2532 = vsel %vm2528, %v2516, %v2531
  %v2533 = vsel %vm2527, %v2530, %v2532
  %v2534 = vsel %vm2526, %v2513, %v2516
  %v2535 = vsel %vm2529, %v2522, 920167782
  %v2536 = vsel %vm2528, %v2519, %v2535
  %v2537 = vsel %vm2527, %v2534, %v2536
  %v2538 = vsel %vm2526, %v2516, %v2519
  %v2539 = vsel %vm2529, %v2525, 1326507024
  %v2540 = vsel %vm2528, %v2522, %v2539
  %v2541 = vsel %vm2527, %v2538, %v2540
  %v2542 = vshll.u32 %v2502, 8
  %v2543 = vmul.u32.u64.compose %v2542, %v2541
  %v2544 = vextract.low.u32 %v2543
  %v2545 = vextract.high.u32 %v2543
  %v2546 = vmul.u32.u64.compose %v2542, %v2537
  %v2547 = vextract.low.u32 %v2546
  %v2548 = vextract.high.u32 %v2546
  %v2549 = vmul.u32 %v2542, %v2533
  %v2550 = vadd.s32 %v2545, %v2547
  %vm2551 = vc.u32 %v2545, %v2547
  %v2552 = vadd.s32 %v2548, 1
  %v2553 = vsel %vm2551, %v2552, %v2548
  %v2554 = vadd.s32 %v2549, %v2553
  %v2555 = vadd.s32 %v2554, 536870912
  %v2556 = vshrl.u32 %v2555, 30
  %v2557 = vshll.u32 %v2556, 30
  %v2558 = vsub.s32 %v2554, %v2557
  %vm2559 = vcmp.lt.s32.totalorder %v2558, 0
  %v2560 = vsub.s32 0, %v2558
  %v2561 = vsel %vm2559, %v2560, %v2558
  %v2562 = vclz %v2561
  %v2563 = vsub.s32 %v2562, 2
  %vm2564 = vcmp.gt.s32.totalorder 0, %v2563
  %v2565 = vsel %vm2564, 0, %v2563
  %v2566 = vsub.s32 32, %v2565
  %v2567 = vshll.u32 %v2558, %v2565
  %v2568 = vshrl.u32 %v2550, %v2566
  %v2569 = vor.u32 %v2567, %v2568
  %v2570 = vsub.s32 4294967266, %v2565
  %v2571 = vadd.s32 %v2570, 127
  %v2572 = vshll.u32 %v2571, 23
  %v2573 = vor.u32 4788187, %v2572
  %v2574 = vand.u32 2147483647, %v2573
  %v2576 = vcvt.s32.f32 %v2569
  %v2577 = vmul.f32 %v2576, %v2574
  %v2578 = vxor.u32 %v2577, 2147483648
  %v2579 = vsel %vm2496, %v2578, %v2577
  %v2580 = vsub.s32 4, %v2556
  %v2581 = vsel %vm2496, %v2580, %v2556
  %v2582 = vsel %vm2495, %v531, %v2579
  %v2583 = vsel %vm2495, 0, %v2581
  %v2584 = vcosq.f32.pop %v2582
  %v2585 = vsinq.f32.pop %v2582
  %vm2586 = vweird.f32 %v531
  %v2587 = vand.u32 %v2583, 3
  %vm2588 = vcmp.lt.s32.totalorder %v2587, 2
  %vm2589 = vcmp.eq.s32.totalorder %v2587, 0
  %v2590 = vxor.u32 %v2585, 2147483648
  %v2591 = vsel %vm2589, %v2584, %v2590
  %vm2592 = vcmp.eq.s32.totalorder %v2587, 2
  %v2593 = vxor.u32 %v2584, 2147483648
  %v2594 = vsel %vm2592, %v2593, %v2585
  %v2595 = vsel %vm2588, %v2591, %v2594
  %v2596 = vsel %vm2586, nan, %v2595
  %v2597 = vand.u32 2147483647, %v532
  %vm2598 = vcmp.le.f32.partialorder %v2597, 0.7853982
  %vm2599 = vcmp.lt.s32.totalorder %v532, 0
  %v2600 = vand.u32 %v532, 2139095040
  %v2601 = vshrl.u32 %v2600, 23
  %v2602 = vsub.s32 %v2601, 127
  %v2603 = vand.u32 2147483647, %v532
  %v2604 = vand.u32 %v2603, 8388607
  %v2605 = vor.u32 %v2604, 8388608
  %v2606 = vsub.s32 0, %v2605
  %v2607 = vadd.s32 %v2602, 1
  %vm2608 = vcmp.gt.s32.totalorder %v2607, 0
  %v2609 = vsel %vm2608, %v2607, 0
  %v2610 = vshrl.u32 %v2609, 5
  %v2611 = vand.u32 %v2609, 31
  %v2612 = vsub.s32 32, %v2611
  %v2613 = vshrl.u32 683565275, %v2612
  %v2614 = vshll.u32 683565275, %v2611
  %v2615 = vshrl.u32 2475754826, %v2612
  %v2616 = vor.u32 %v2614, %v2615
  %v2617 = vshll.u32 2475754826, %v2611
  %v2618 = vshrl.u32 2131351028, %v2612
  %v2619 = vor.u32 %v2617, %v2618
  %v2620 = vshll.u32 2131351028, %v2611
  %v2621 = vshrl.u32 2102212464, %v2612
  %v2622 = vor.u32 %v2620, %v2621
  %v2623 = vshll.u32 2102212464, %v2611
  %v2624 = vshrl.u32 920167782, %v2612
  %v2625 = vor.u32 %v2623, %v2624
  %v2626 = vshll.u32 920167782, %v2611
  %v2627 = vshrl.u32 1326507024, %v2612
  %v2628 = vor.u32 %v2626, %v2627
  %vm2629 = vcmp.lt.s32.totalorder %v2610, 1
  %vm2630 = vcmp.lt.s32.totalorder %v2610, 2
  %vm2631 = vcmp.lt.s32.totalorder %v2610, 3
  %vm2632 = vcmp.lt.s32.totalorder %v2610, 4
  %v2633 = vsel %vm2629, %v2613, %v2616
  %v2634 = vsel %vm2632, %v2622, 2102212464
  %v2635 = vsel %vm2631, %v2619, %v2634
  %v2636 = vsel %vm2630, %v2633, %v2635
  %v2637 = vsel %vm2629, %v2616, %v2619
  %v2638 = vsel %vm2632, %v2625, 920167782
  %v2639 = vsel %vm2631, %v2622, %v2638
  %v2640 = vsel %vm2630, %v2637, %v2639
  %v2641 = vsel %vm2629, %v2619, %v2622
  %v2642 = vsel %vm2632, %v2628, 1326507024
  %v2643 = vsel %vm2631, %v2625, %v2642
  %v2644 = vsel %vm2630, %v2641, %v2643
  %v2645 = vshll.u32 %v2605, 8
  %v2646 = vmul.u32.u64.compose %v2645, %v2644
  %v2647 = vextract.low.u32 %v2646
  %v2648 = vextract.high.u32 %v2646
  %v2649 = vmul.u32.u64.compose %v2645, %v2640
  %v2650 = vextract.low.u32 %v2649
  %v2651 = vextract.high.u32 %v2649
  %v2652 = vmul.u32 %v2645, %v2636
  %v2653 = vadd.s32 %v2648, %v2650
  %vm2654 = vc.u32 %v2648, %v2650
  %v2655 = vadd.s32 %v2651, 1
  %v2656 = vsel %vm2654, %v2655, %v2651
  %v2657 = vadd.s32 %v2652, %v2656
  %v2658 = vadd.s32 %v2657, 536870912
  %v2659 = vshrl.u32 %v2658, 30
  %v2660 = vshll.u32 %v2659, 30
  %v2661 = vsub.s32 %v2657, %v2660
  %vm2662 = vcmp.lt.s32.totalorder %v2661, 0
  %v2663 = vsub.s32 0, %v2661
  %v2664 = vsel %vm2662, %v2663, %v2661
  %v2665 = vclz %v2664
  %v2666 = vsub.s32 %v2665, 2
  %vm2667 = vcmp.gt.s32.totalorder 0, %v2666
  %v2668 = vsel %vm2667, 0, %v2666
  %v2669 = vsub.s32 32, %v2668
  %v2670 = vshll.u32 %v2661, %v2668
  %v2671 = vshrl.u32 %v2653, %v2669
  %v2672 = vor.u32 %v2670, %v2671
  %v2673 = vsub.s32 4294967266, %v2668
  %v2674 = vadd.s32 %v2673, 127
  %v2675 = vshll.u32 %v2674, 23
  %v2676 = vor.u32 4788187, %v2675
  %v2677 = vand.u32 2147483647, %v2676
  %v2679 = vcvt.s32.f32 %v2672
  %v2680 = vmul.f32 %v2679, %v2677
  %v2681 = vxor.u32 %v2680, 2147483648
  %v2682 = vsel %vm2599, %v2681, %v2680
  %v2683 = vsub.s32 4, %v2659
  %v2684 = vsel %vm2599, %v2683, %v2659
  %v2685 = vsel %vm2598, %v532, %v2682
  %v2686 = vsel %vm2598, 0, %v2684
  %v2687 = vcosq.f32.pop %v2685
  %v2688 = vsinq.f32.pop %v2685
  %vm2689 = vweird.f32 %v532
  %v2690 = vand.u32 %v2686, 3
  %vm2691 = vcmp.lt.s32.totalorder %v2690, 2
  %vm2692 = vcmp.eq.s32.totalorder %v2690, 0
  %v2693 = vxor.u32 %v2688, 2147483648
  %v2694 = vsel %vm2692, %v2687, %v2693
  %vm2695 = vcmp.eq.s32.totalorder %v2690, 2
  %v2696 = vxor.u32 %v2687, 2147483648
  %v2697 = vsel %vm2695, %v2696, %v2688
  %v2698 = vsel %vm2691, %v2694, %v2697
  %v2699 = vsel %vm2689, nan, %v2698
  %v2700 = vand.u32 2147483647, %v533
  %vm2701 = vcmp.le.f32.partialorder %v2700, 0.7853982
  %vm2702 = vcmp.lt.s32.totalorder %v533, 0
  %v2703 = vand.u32 %v533, 2139095040
  %v2704 = vshrl.u32 %v2703, 23
  %v2705 = vsub.s32 %v2704, 127
  %v2706 = vand.u32 2147483647, %v533
  %v2707 = vand.u32 %v2706, 8388607
  %v2708 = vor.u32 %v2707, 8388608
  %v2709 = vsub.s32 0, %v2708
  %v2710 = vadd.s32 %v2705, 1
  %vm2711 = vcmp.gt.s32.totalorder %v2710, 0
  %v2712 = vsel %vm2711, %v2710, 0
  %v2713 = vshrl.u32 %v2712, 5
  %v2714 = vand.u32 %v2712, 31
  %v2715 = vsub.s32 32, %v2714
  %v2716 = vshrl.u32 683565275, %v2715
  %v2717 = vshll.u32 683565275, %v2714
  %v2718 = vshrl.u32 2475754826, %v2715
  %v2719 = vor.u32 %v2717, %v2718
  %v2720 = vshll.u32 2475754826, %v2714
  %v2721 = vshrl.u32 2131351028, %v2715
  %v2722 = vor.u32 %v2720, %v2721
  %v2723 = vshll.u32 2131351028, %v2714
  %v2724 = vshrl.u32 2102212464, %v2715
  %v2725 = vor.u32 %v2723, %v2724
  %v2726 = vshll.u32 2102212464, %v2714
  %v2727 = vshrl.u32 920167782, %v2715
  %v2728 = vor.u32 %v2726, %v2727
  %v2729 = vshll.u32 920167782, %v2714
  %v2730 = vshrl.u32 1326507024, %v2715
  %v2731 = vor.u32 %v2729, %v2730
  %vm2732 = vcmp.lt.s32.totalorder %v2713, 1
  %vm2733 = vcmp.lt.s32.totalorder %v2713, 2
  %vm2734 = vcmp.lt.s32.totalorder %v2713, 3
  %vm2735 = vcmp.lt.s32.totalorder %v2713, 4
  %v2736 = vsel %vm2732, %v2716, %v2719
  %v2737 = vsel %vm2735, %v2725, 2102212464
  %v2738 = vsel %vm2734, %v2722, %v2737
  %v2739 = vsel %vm2733, %v2736, %v2738
  %v2740 = vsel %vm2732, %v2719, %v2722
  %v2741 = vsel %vm2735, %v2728, 920167782
  %v2742 = vsel %vm2734, %v2725, %v2741
  %v2743 = vsel %vm2733, %v2740, %v2742
  %v2744 = vsel %vm2732, %v2722, %v2725
  %v2745 = vsel %vm2735, %v2731, 1326507024
  %v2746 = vsel %vm2734, %v2728, %v2745
  %v2747 = vsel %vm2733, %v2744, %v2746
  %v2748 = vshll.u32 %v2708, 8
  %v2749 = vmul.u32.u64.compose %v2748, %v2747
  %v2750 = vextract.low.u32 %v2749
  %v2751 = vextract.high.u32 %v2749
  %v2752 = vmul.u32.u64.compose %v2748, %v2743
  %v2753 = vextract.low.u32 %v2752
  %v2754 = vextract.high.u32 %v2752
  %v2755 = vmul.u32 %v2748, %v2739
  %v2756 = vadd.s32 %v2751, %v2753
  %vm2757 = vc.u32 %v2751, %v2753
  %v2758 = vadd.s32 %v2754, 1
  %v2759 = vsel %vm2757, %v2758, %v2754
  %v2760 = vadd.s32 %v2755, %v2759
  %v2761 = vadd.s32 %v2760, 536870912
  %v2762 = vshrl.u32 %v2761, 30
  %v2763 = vshll.u32 %v2762, 30
  %v2764 = vsub.s32 %v2760, %v2763
  %vm2765 = vcmp.lt.s32.totalorder %v2764, 0
  %v2766 = vsub.s32 0, %v2764
  %v2767 = vsel %vm2765, %v2766, %v2764
  %v2768 = vclz %v2767
  %v2769 = vsub.s32 %v2768, 2
  %vm2770 = vcmp.gt.s32.totalorder 0, %v2769
  %v2771 = vsel %vm2770, 0, %v2769
  %v2772 = vsub.s32 32, %v2771
  %v2773 = vshll.u32 %v2764, %v2771
  %v2774 = vshrl.u32 %v2756, %v2772
  %v2775 = vor.u32 %v2773, %v2774
  %v2776 = vsub.s32 4294967266, %v2771
  %v2777 = vadd.s32 %v2776, 127
  %v2778 = vshll.u32 %v2777, 23
  %v2779 = vor.u32 4788187, %v2778
  %v2780 = vand.u32 2147483647, %v2779
  %v2782 = vcvt.s32.f32 %v2775
  %v2783 = vmul.f32 %v2782, %v2780
  %v2784 = vxor.u32 %v2783, 2147483648
  %v2785 = vsel %vm2702, %v2784, %v2783
  %v2786 = vsub.s32 4, %v2762
  %v2787 = vsel %vm2702, %v2786, %v2762
  %v2788 = vsel %vm2701, %v533, %v2785
  %v2789 = vsel %vm2701, 0, %v2787
  %v2790 = vcosq.f32.pop %v2788
  %v2791 = vsinq.f32.pop %v2788
  %vm2792 = vweird.f32 %v533
  %v2793 = vand.u32 %v2789, 3
  %vm2794 = vcmp.lt.s32.totalorder %v2793, 2
  %vm2795 = vcmp.eq.s32.totalorder %v2793, 0
  %v2796 = vxor.u32 %v2791, 2147483648
  %v2797 = vsel %vm2795, %v2790, %v2796
  %vm2798 = vcmp.eq.s32.totalorder %v2793, 2
  %v2799 = vxor.u32 %v2790, 2147483648
  %v2800 = vsel %vm2798, %v2799, %v2791
  %v2801 = vsel %vm2794, %v2797, %v2800
  %v2802 = vsel %vm2792, nan, %v2801
  %v2803 = vand.u32 2147483647, %v534
  %vm2804 = vcmp.le.f32.partialorder %v2803, 0.7853982
  %vm2805 = vcmp.lt.s32.totalorder %v534, 0
  %v2806 = vand.u32 %v534, 2139095040
  %v2807 = vshrl.u32 %v2806, 23
  %v2808 = vsub.s32 %v2807, 127
  %v2809 = vand.u32 2147483647, %v534
  %v2810 = vand.u32 %v2809, 8388607
  %v2811 = vor.u32 %v2810, 8388608
  %v2812 = vsub.s32 0, %v2811
  %v2813 = vadd.s32 %v2808, 1
  %vm2814 = vcmp.gt.s32.totalorder %v2813, 0
  %v2815 = vsel %vm2814, %v2813, 0
  %v2816 = vshrl.u32 %v2815, 5
  %v2817 = vand.u32 %v2815, 31
  %v2818 = vsub.s32 32, %v2817
  %v2819 = vshrl.u32 683565275, %v2818
  %v2820 = vshll.u32 683565275, %v2817
  %v2821 = vshrl.u32 2475754826, %v2818
  %v2822 = vor.u32 %v2820, %v2821
  %v2823 = vshll.u32 2475754826, %v2817
  %v2824 = vshrl.u32 2131351028, %v2818
  %v2825 = vor.u32 %v2823, %v2824
  %v2826 = vshll.u32 2131351028, %v2817
  %v2827 = vshrl.u32 2102212464, %v2818
  %v2828 = vor.u32 %v2826, %v2827
  %v2829 = vshll.u32 2102212464, %v2817
  %v2830 = vshrl.u32 920167782, %v2818
  %v2831 = vor.u32 %v2829, %v2830
  %v2832 = vshll.u32 920167782, %v2817
  %v2833 = vshrl.u32 1326507024, %v2818
  %v2834 = vor.u32 %v2832, %v2833
  %vm2835 = vcmp.lt.s32.totalorder %v2816, 1
  %vm2836 = vcmp.lt.s32.totalorder %v2816, 2
  %vm2837 = vcmp.lt.s32.totalorder %v2816, 3
  %vm2838 = vcmp.lt.s32.totalorder %v2816, 4
  %v2839 = vsel %vm2835, %v2819, %v2822
  %v2840 = vsel %vm2838, %v2828, 2102212464
  %v2841 = vsel %vm2837, %v2825, %v2840
  %v2842 = vsel %vm2836, %v2839, %v2841
  %v2843 = vsel %vm2835, %v2822, %v2825
  %v2844 = vsel %vm2838, %v2831, 920167782
  %v2845 = vsel %vm2837, %v2828, %v2844
  %v2846 = vsel %vm2836, %v2843, %v2845
  %v2847 = vsel %vm2835, %v2825, %v2828
  %v2848 = vsel %vm2838, %v2834, 1326507024
  %v2849 = vsel %vm2837, %v2831, %v2848
  %v2850 = vsel %vm2836, %v2847, %v2849
  %v2851 = vshll.u32 %v2811, 8
  %v2852 = vmul.u32.u64.compose %v2851, %v2850
  %v2853 = vextract.low.u32 %v2852
  %v2854 = vextract.high.u32 %v2852
  %v2855 = vmul.u32.u64.compose %v2851, %v2846
  %v2856 = vextract.low.u32 %v2855
  %v2857 = vextract.high.u32 %v2855
  %v2858 = vmul.u32 %v2851, %v2842
  %v2859 = vadd.s32 %v2854, %v2856
  %vm2860 = vc.u32 %v2854, %v2856
  %v2861 = vadd.s32 %v2857, 1
  %v2862 = vsel %vm2860, %v2861, %v2857
  %v2863 = vadd.s32 %v2858, %v2862
  %v2864 = vadd.s32 %v2863, 536870912
  %v2865 = vshrl.u32 %v2864, 30
  %v2866 = vshll.u32 %v2865, 30
  %v2867 = vsub.s32 %v2863, %v2866
  %vm2868 = vcmp.lt.s32.totalorder %v2867, 0
  %v2869 = vsub.s32 0, %v2867
  %v2870 = vsel %vm2868, %v2869, %v2867
  %v2871 = vclz %v2870
  %v2872 = vsub.s32 %v2871, 2
  %vm2873 = vcmp.gt.s32.totalorder 0, %v2872
  %v2874 = vsel %vm2873, 0, %v2872
  %v2875 = vsub.s32 32, %v2874
  %v2876 = vshll.u32 %v2867, %v2874
  %v2877 = vshrl.u32 %v2859, %v2875
  %v2878 = vor.u32 %v2876, %v2877
  %v2879 = vsub.s32 4294967266, %v2874
  %v2880 = vadd.s32 %v2879, 127
  %v2881 = vshll.u32 %v2880, 23
  %v2882 = vor.u32 4788187, %v2881
  %v2883 = vand.u32 2147483647, %v2882
  %v2885 = vcvt.s32.f32 %v2878
  %v2886 = vmul.f32 %v2885, %v2883
  %v2887 = vxor.u32 %v2886, 2147483648
  %v2888 = vsel %vm2805, %v2887, %v2886
  %v2889 = vsub.s32 4, %v2865
  %v2890 = vsel %vm2805, %v2889, %v2865
  %v2891 = vsel %vm2804, %v534, %v2888
  %v2892 = vsel %vm2804, 0, %v2890
  %v2893 = vcosq.f32.pop %v2891
  %v2894 = vsinq.f32.pop %v2891
  %vm2895 = vweird.f32 %v534
  %v2896 = vand.u32 %v2892, 3
  %vm2897 = vcmp.lt.s32.totalorder %v2896, 2
  %vm2898 = vcmp.eq.s32.totalorder %v2896, 0
  %v2899 = vxor.u32 %v2894, 2147483648
  %v2900 = vsel %vm2898, %v2893, %v2899
  %vm2901 = vcmp.eq.s32.totalorder %v2896, 2
  %v2902 = vxor.u32 %v2893, 2147483648
  %v2903 = vsel %vm2901, %v2902, %v2894
  %v2904 = vsel %vm2897, %v2900, %v2903
  %v2905 = vsel %vm2895, nan, %v2904
  %v2906 = vand.u32 2147483647, %v535
  %vm2907 = vcmp.le.f32.partialorder %v2906, 0.7853982
  %vm2908 = vcmp.lt.s32.totalorder %v535, 0
  %v2909 = vand.u32 %v535, 2139095040
  %v2910 = vshrl.u32 %v2909, 23
  %v2911 = vsub.s32 %v2910, 127
  %v2912 = vand.u32 2147483647, %v535
  %v2913 = vand.u32 %v2912, 8388607
  %v2914 = vor.u32 %v2913, 8388608
  %v2915 = vsub.s32 0, %v2914
  %v2916 = vadd.s32 %v2911, 1
  %vm2917 = vcmp.gt.s32.totalorder %v2916, 0
  %v2918 = vsel %vm2917, %v2916, 0
  %v2919 = vshrl.u32 %v2918, 5
  %v2920 = vand.u32 %v2918, 31
  %v2921 = vsub.s32 32, %v2920
  %v2922 = vshrl.u32 683565275, %v2921
  %v2923 = vshll.u32 683565275, %v2920
  %v2924 = vshrl.u32 2475754826, %v2921
  %v2925 = vor.u32 %v2923, %v2924
  %v2926 = vshll.u32 2475754826, %v2920
  %v2927 = vshrl.u32 2131351028, %v2921
  %v2928 = vor.u32 %v2926, %v2927
  %v2929 = vshll.u32 2131351028, %v2920
  %v2930 = vshrl.u32 2102212464, %v2921
  %v2931 = vor.u32 %v2929, %v2930
  %v2932 = vshll.u32 2102212464, %v2920
  %v2933 = vshrl.u32 920167782, %v2921
  %v2934 = vor.u32 %v2932, %v2933
  %v2935 = vshll.u32 920167782, %v2920
  %v2936 = vshrl.u32 1326507024, %v2921
  %v2937 = vor.u32 %v2935, %v2936
  %vm2938 = vcmp.lt.s32.totalorder %v2919, 1
  %vm2939 = vcmp.lt.s32.totalorder %v2919, 2
  %vm2940 = vcmp.lt.s32.totalorder %v2919, 3
  %vm2941 = vcmp.lt.s32.totalorder %v2919, 4
  %v2942 = vsel %vm2938, %v2922, %v2925
  %v2943 = vsel %vm2941, %v2931, 2102212464
  %v2944 = vsel %vm2940, %v2928, %v2943
  %v2945 = vsel %vm2939, %v2942, %v2944
  %v2946 = vsel %vm2938, %v2925, %v2928
  %v2947 = vsel %vm2941, %v2934, 920167782
  %v2948 = vsel %vm2940, %v2931, %v2947
  %v2949 = vsel %vm2939, %v2946, %v2948
  %v2950 = vsel %vm2938, %v2928, %v2931
  %v2951 = vsel %vm2941, %v2937, 1326507024
  %v2952 = vsel %vm2940, %v2934, %v2951
  %v2953 = vsel %vm2939, %v2950, %v2952
  %v2954 = vshll.u32 %v2914, 8
  %v2955 = vmul.u32.u64.compose %v2954, %v2953
  %v2956 = vextract.low.u32 %v2955
  %v2957 = vextract.high.u32 %v2955
  %v2958 = vmul.u32.u64.compose %v2954, %v2949
  %v2959 = vextract.low.u32 %v2958
  %v2960 = vextract.high.u32 %v2958
  %v2961 = vmul.u32 %v2954, %v2945
  %v2962 = vadd.s32 %v2957, %v2959
  %vm2963 = vc.u32 %v2957, %v2959
  %v2964 = vadd.s32 %v2960, 1
  %v2965 = vsel %vm2963, %v2964, %v2960
  %v2966 = vadd.s32 %v2961, %v2965
  %v2967 = vadd.s32 %v2966, 536870912
  %v2968 = vshrl.u32 %v2967, 30
  %v2969 = vshll.u32 %v2968, 30
  %v2970 = vsub.s32 %v2966, %v2969
  %vm2971 = vcmp.lt.s32.totalorder %v2970, 0
  %v2972 = vsub.s32 0, %v2970
  %v2973 = vsel %vm2971, %v2972, %v2970
  %v2974 = vclz %v2973
  %v2975 = vsub.s32 %v2974, 2
  %vm2976 = vcmp.gt.s32.totalorder 0, %v2975
  %v2977 = vsel %vm2976, 0, %v2975
  %v2978 = vsub.s32 32, %v2977
  %v2979 = vshll.u32 %v2970, %v2977
  %v2980 = vshrl.u32 %v2962, %v2978
  %v2981 = vor.u32 %v2979, %v2980
  %v2982 = vsub.s32 4294967266, %v2977
  %v2983 = vadd.s32 %v2982, 127
  %v2984 = vshll.u32 %v2983, 23
  %v2985 = vor.u32 4788187, %v2984
  %v2986 = vand.u32 2147483647, %v2985
  %v2988 = vcvt.s32.f32 %v2981
  %v2989 = vmul.f32 %v2988, %v2986
  %v2990 = vxor.u32 %v2989, 2147483648
  %v2991 = vsel %vm2908, %v2990, %v2989
  %v2992 = vsub.s32 4, %v2968
  %v2993 = vsel %vm2908, %v2992, %v2968
  %v2994 = vsel %vm2907, %v535, %v2991
  %v2995 = vsel %vm2907, 0, %v2993
  %v2996 = vcosq.f32.pop %v2994
  %v2997 = vsinq.f32.pop %v2994
  %vm2998 = vweird.f32 %v535
  %v2999 = vand.u32 %v2995, 3
  %vm3000 = vcmp.lt.s32.totalorder %v2999, 2
  %vm3001 = vcmp.eq.s32.totalorder %v2999, 0
  %v3002 = vxor.u32 %v2997, 2147483648
  %v3003 = vsel %vm3001, %v2996, %v3002
  %vm3004 = vcmp.eq.s32.totalorder %v2999, 2
  %v3005 = vxor.u32 %v2996, 2147483648
  %v3006 = vsel %vm3004, %v3005, %v2997
  %v3007 = vsel %vm3000, %v3003, %v3006
  %v3008 = vsel %vm2998, nan, %v3007
  %v3009 = vand.u32 2147483647, %v536
  %vm3010 = vcmp.le.f32.partialorder %v3009, 0.7853982
  %vm3011 = vcmp.lt.s32.totalorder %v536, 0
  %v3012 = vand.u32 %v536, 2139095040
  %v3013 = vshrl.u32 %v3012, 23
  %v3014 = vsub.s32 %v3013, 127
  %v3015 = vand.u32 2147483647, %v536
  %v3016 = vand.u32 %v3015, 8388607
  %v3017 = vor.u32 %v3016, 8388608
  %v3018 = vsub.s32 0, %v3017
  %v3019 = vadd.s32 %v3014, 1
  %vm3020 = vcmp.gt.s32.totalorder %v3019, 0
  %v3021 = vsel %vm3020, %v3019, 0
  %v3022 = vshrl.u32 %v3021, 5
  %v3023 = vand.u32 %v3021, 31
  %v3024 = vsub.s32 32, %v3023
  %v3025 = vshrl.u32 683565275, %v3024
  %v3026 = vshll.u32 683565275, %v3023
  %v3027 = vshrl.u32 2475754826, %v3024
  %v3028 = vor.u32 %v3026, %v3027
  %v3029 = vshll.u32 2475754826, %v3023
  %v3030 = vshrl.u32 2131351028, %v3024
  %v3031 = vor.u32 %v3029, %v3030
  %v3032 = vshll.u32 2131351028, %v3023
  %v3033 = vshrl.u32 2102212464, %v3024
  %v3034 = vor.u32 %v3032, %v3033
  %v3035 = vshll.u32 2102212464, %v3023
  %v3036 = vshrl.u32 920167782, %v3024
  %v3037 = vor.u32 %v3035, %v3036
  %v3038 = vshll.u32 920167782, %v3023
  %v3039 = vshrl.u32 1326507024, %v3024
  %v3040 = vor.u32 %v3038, %v3039
  %vm3041 = vcmp.lt.s32.totalorder %v3022, 1
  %vm3042 = vcmp.lt.s32.totalorder %v3022, 2
  %vm3043 = vcmp.lt.s32.totalorder %v3022, 3
  %vm3044 = vcmp.lt.s32.totalorder %v3022, 4
  %v3045 = vsel %vm3041, %v3025, %v3028
  %v3046 = vsel %vm3044, %v3034, 2102212464
  %v3047 = vsel %vm3043, %v3031, %v3046
  %v3048 = vsel %vm3042, %v3045, %v3047
  %v3049 = vsel %vm3041, %v3028, %v3031
  %v3050 = vsel %vm3044, %v3037, 920167782
  %v3051 = vsel %vm3043, %v3034, %v3050
  %v3052 = vsel %vm3042, %v3049, %v3051
  %v3053 = vsel %vm3041, %v3031, %v3034
  %v3054 = vsel %vm3044, %v3040, 1326507024
  %v3055 = vsel %vm3043, %v3037, %v3054
  %v3056 = vsel %vm3042, %v3053, %v3055
  %v3057 = vshll.u32 %v3017, 8
  %v3058 = vmul.u32.u64.compose %v3057, %v3056
  %v3059 = vextract.low.u32 %v3058
  %v3060 = vextract.high.u32 %v3058
  %v3061 = vmul.u32.u64.compose %v3057, %v3052
  %v3062 = vextract.low.u32 %v3061
  %v3063 = vextract.high.u32 %v3061
  %v3064 = vmul.u32 %v3057, %v3048
  %v3065 = vadd.s32 %v3060, %v3062
  %vm3066 = vc.u32 %v3060, %v3062
  %v3067 = vadd.s32 %v3063, 1
  %v3068 = vsel %vm3066, %v3067, %v3063
  %v3069 = vadd.s32 %v3064, %v3068
  %v3070 = vadd.s32 %v3069, 536870912
  %v3071 = vshrl.u32 %v3070, 30
  %v3072 = vshll.u32 %v3071, 30
  %v3073 = vsub.s32 %v3069, %v3072
  %vm3074 = vcmp.lt.s32.totalorder %v3073, 0
  %v3075 = vsub.s32 0, %v3073
  %v3076 = vsel %vm3074, %v3075, %v3073
  %v3077 = vclz %v3076
  %v3078 = vsub.s32 %v3077, 2
  %vm3079 = vcmp.gt.s32.totalorder 0, %v3078
  %v3080 = vsel %vm3079, 0, %v3078
  %v3081 = vsub.s32 32, %v3080
  %v3082 = vshll.u32 %v3073, %v3080
  %v3083 = vshrl.u32 %v3065, %v3081
  %v3084 = vor.u32 %v3082, %v3083
  %v3085 = vsub.s32 4294967266, %v3080
  %v3086 = vadd.s32 %v3085, 127
  %v3087 = vshll.u32 %v3086, 23
  %v3088 = vor.u32 4788187, %v3087
  %v3089 = vand.u32 2147483647, %v3088
  %v3091 = vcvt.s32.f32 %v3084
  %v3092 = vmul.f32 %v3091, %v3089
  %v3093 = vxor.u32 %v3092, 2147483648
  %v3094 = vsel %vm3011, %v3093, %v3092
  %v3095 = vsub.s32 4, %v3071
  %v3096 = vsel %vm3011, %v3095, %v3071
  %v3097 = vsel %vm3010, %v536, %v3094
  %v3098 = vsel %vm3010, 0, %v3096
  %v3099 = vcosq.f32.pop %v3097
  %v3100 = vsinq.f32.pop %v3097
  %vm3101 = vweird.f32 %v536
  %v3102 = vand.u32 %v3098, 3
  %vm3103 = vcmp.lt.s32.totalorder %v3102, 2
  %vm3104 = vcmp.eq.s32.totalorder %v3102, 0
  %v3105 = vxor.u32 %v3100, 2147483648
  %v3106 = vsel %vm3104, %v3099, %v3105
  %vm3107 = vcmp.eq.s32.totalorder %v3102, 2
  %v3108 = vxor.u32 %v3099, 2147483648
  %v3109 = vsel %vm3107, %v3108, %v3100
  %v3110 = vsel %vm3103, %v3106, %v3109
  %v3111 = vsel %vm3101, nan, %v3110
  %v3112 = vld [vmem:[%s3] sm:$0xff]
  %v3113 = vld [vmem:[%s3 + $0x8] sm:$0xff]
  %v3114 = vld [vmem:[%s3 + $0x10] sm:$0xff]
  %v3115 = vld [vmem:[%s3 + $0x18] sm:$0xff]
  %v3116 = vld [vmem:[%s3 + $0x20] sm:$0xff]
  %v3117 = vld [vmem:[%s3 + $0x28] sm:$0xff]
  %v3118 = vld [vmem:[%s3 + $0x30] sm:$0xff]
  %v3119 = vld [vmem:[%s3 + $0x38] sm:$0xff]
  %v3120 = vld [vmem:[%s3 + $0x40] sm:$0xff]
  %v3121 = vld [vmem:[%s3 + $0x48] sm:$0xff]
  %v3122 = vld [vmem:[%s3 + $0x50] sm:$0xff]
  %v3123 = vld [vmem:[%s3 + $0x58] sm:$0xff]
  %v3124 = vld [vmem:[%s3 + $0x60] sm:$0xff]
  %v3125 = vld [vmem:[%s3 + $0x68] sm:$0xff]
  %v3126 = vld [vmem:[%s3 + $0x70] sm:$0xff]
  %v3127 = vld [vmem:[%s3 + $0x78] sm:$0xff]
  %v3128 = vld [vmem:[%s3 + $0x80] sm:$0xff]
  %v3129 = vld [vmem:[%s3 + $0x88] sm:$0xff]
  %v3130 = vld [vmem:[%s3 + $0x90] sm:$0xff]
  %v3131 = vld [vmem:[%s3 + $0x98] sm:$0xff]
  %v3132 = vld [vmem:[%s3 + $0xa0] sm:$0xff]
  %v3133 = vld [vmem:[%s3 + $0xa8] sm:$0xff]
  %v3134 = vld [vmem:[%s3 + $0xb0] sm:$0xff]
  %v3135 = vld [vmem:[%s3 + $0xb8] sm:$0xff]
  %v3136 = vld [vmem:[%s3 + $0xc0] sm:$0xff]
  %3162 = vrot.lane.b32.xlu0 %v3112, 32
  %v3163 = vpop.permute.xlu0 %3162
  %3164 = vrot.lane.b32.xlu0 %v3113, 32
  %v3165 = vpop.permute.xlu0 %3164
  %3166 = vrot.lane.b32.xlu0 %v3114, 32
  %v3167 = vpop.permute.xlu0 %3166
  %3168 = vrot.lane.b32.xlu0 %v3115, 32
  %v3169 = vpop.permute.xlu0 %3168
  %3170 = vrot.lane.b32.xlu0 %v3116, 32
  %v3171 = vpop.permute.xlu0 %3170
  %3172 = vrot.lane.b32.xlu0 %v3117, 32
  %v3173 = vpop.permute.xlu0 %3172
  %3174 = vrot.lane.b32.xlu0 %v3118, 32
  %v3175 = vpop.permute.xlu0 %3174
  %3176 = vrot.lane.b32.xlu0 %v3119, 32
  %v3177 = vpop.permute.xlu0 %3176
  %3178 = vrot.lane.b32.xlu0 %v3120, 32
  %v3179 = vpop.permute.xlu0 %3178
  %3180 = vrot.lane.b32.xlu0 %v3121, 32
  %v3181 = vpop.permute.xlu0 %3180
  %3182 = vrot.lane.b32.xlu0 %v3122, 32
  %v3183 = vpop.permute.xlu0 %3182
  %3184 = vrot.lane.b32.xlu0 %v3123, 32
  %v3185 = vpop.permute.xlu0 %3184
  %3186 = vrot.lane.b32.xlu0 %v3124, 32
  %v3187 = vpop.permute.xlu0 %3186
  %3188 = vrot.lane.b32.xlu0 %v3125, 32
  %v3189 = vpop.permute.xlu0 %3188
  %3190 = vrot.lane.b32.xlu0 %v3126, 32
  %v3191 = vpop.permute.xlu0 %3190
  %3192 = vrot.lane.b32.xlu0 %v3127, 32
  %v3193 = vpop.permute.xlu0 %3192
  %3194 = vrot.lane.b32.xlu0 %v3128, 32
  %v3195 = vpop.permute.xlu0 %3194
  %3196 = vrot.lane.b32.xlu0 %v3129, 32
  %v3197 = vpop.permute.xlu0 %3196
  %3198 = vrot.lane.b32.xlu0 %v3130, 32
  %v3199 = vpop.permute.xlu0 %3198
  %3200 = vrot.lane.b32.xlu0 %v3131, 32
  %v3201 = vpop.permute.xlu0 %3200
  %3202 = vrot.lane.b32.xlu0 %v3132, 32
  %v3203 = vpop.permute.xlu0 %3202
  %3204 = vrot.lane.b32.xlu0 %v3133, 32
  %v3205 = vpop.permute.xlu0 %3204
  %3206 = vrot.lane.b32.xlu0 %v3134, 32
  %v3207 = vpop.permute.xlu0 %3206
  %3208 = vrot.lane.b32.xlu0 %v3135, 32
  %v3209 = vpop.permute.xlu0 %3208
  %3210 = vrot.lane.b32.xlu0 %v3136, 32
  %v3211 = vpop.permute.xlu0 %3210
  %vm3237 = vcmask 261120
  %v3238 = vsel %vm3237, %v639, %v3163
  %v3239 = vsel %vm3237, %v742, %v3165
  %v3240 = vsel %vm3237, %v845, %v3167
  %v3241 = vsel %vm3237, %v948, %v3169
  %v3242 = vsel %vm3237, %v1051, %v3171
  %v3243 = vsel %vm3237, %v1154, %v3173
  %v3244 = vsel %vm3237, %v1257, %v3175
  %v3245 = vsel %vm3237, %v1360, %v3177
  %v3246 = vsel %vm3237, %v1463, %v3179
  %v3247 = vsel %vm3237, %v1566, %v3181
  %v3248 = vsel %vm3237, %v1669, %v3183
  %v3249 = vsel %vm3237, %v1772, %v3185
  %v3250 = vsel %vm3237, %v1875, %v3187
  %v3251 = vsel %vm3237, %v1978, %v3189
  %v3252 = vsel %vm3237, %v2081, %v3191
  %v3253 = vsel %vm3237, %v2184, %v3193
  %v3254 = vsel %vm3237, %v2287, %v3195
  %v3255 = vsel %vm3237, %v2390, %v3197
  %v3256 = vsel %vm3237, %v2493, %v3199
  %v3257 = vsel %vm3237, %v2596, %v3201
  %v3258 = vsel %vm3237, %v2699, %v3203
  %v3259 = vsel %vm3237, %v2802, %v3205
  %v3260 = vsel %vm3237, %v2905, %v3207
  %v3261 = vsel %vm3237, %v3008, %v3209
  %v3262 = vsel %vm3237, %v3111, %v3211
  %vm3263 = vcmask 392192
  %3264 = vst.msk [vmem:[%s4] sm:$0xff] %vm3263, %v3238
  %3265 = vst.msk [vmem:[%s4 + $0x8] sm:$0xff] %vm3263, %v3239
  %3266 = vst.msk [vmem:[%s4 + $0x10] sm:$0xff] %vm3263, %v3240
  %3267 = vst.msk [vmem:[%s4 + $0x18] sm:$0xff] %vm3263, %v3241
  %3268 = vst.msk [vmem:[%s4 + $0x20] sm:$0xff] %vm3263, %v3242
  %3269 = vst.msk [vmem:[%s4 + $0x28] sm:$0xff] %vm3263, %v3243
  %3270 = vst.msk [vmem:[%s4 + $0x30] sm:$0xff] %vm3263, %v3244
  %3271 = vst.msk [vmem:[%s4 + $0x38] sm:$0xff] %vm3263, %v3245
  %3272 = vst.msk [vmem:[%s4 + $0x40] sm:$0xff] %vm3263, %v3246
  %3273 = vst.msk [vmem:[%s4 + $0x48] sm:$0xff] %vm3263, %v3247
  %3274 = vst.msk [vmem:[%s4 + $0x50] sm:$0xff] %vm3263, %v3248
  %3275 = vst.msk [vmem:[%s4 + $0x58] sm:$0xff] %vm3263, %v3249
  %3276 = vst.msk [vmem:[%s4 + $0x60] sm:$0xff] %vm3263, %v3250
  %3277 = vst.msk [vmem:[%s4 + $0x68] sm:$0xff] %vm3263, %v3251
  %3278 = vst.msk [vmem:[%s4 + $0x70] sm:$0xff] %vm3263, %v3252
  %3279 = vst.msk [vmem:[%s4 + $0x78] sm:$0xff] %vm3263, %v3253
  %3280 = vst.msk [vmem:[%s4 + $0x80] sm:$0xff] %vm3263, %v3254
  %3281 = vst.msk [vmem:[%s4 + $0x88] sm:$0xff] %vm3263, %v3255
  %3282 = vst.msk [vmem:[%s4 + $0x90] sm:$0xff] %vm3263, %v3256
  %3283 = vst.msk [vmem:[%s4 + $0x98] sm:$0xff] %vm3263, %v3257
  %3284 = vst.msk [vmem:[%s4 + $0xa0] sm:$0xff] %vm3263, %v3258
  %3285 = vst.msk [vmem:[%s4 + $0xa8] sm:$0xff] %vm3263, %v3259
  %3286 = vst.msk [vmem:[%s4 + $0xb0] sm:$0xff] %vm3263, %v3260
  %3287 = vst.msk [vmem:[%s4 + $0xb8] sm:$0xff] %vm3263, %v3261
  %3288 = vst.msk [vmem:[%s4 + $0xc0] sm:$0xff] %vm3263, %v3262
  // Predicated region
  $region18: #{tpu_custom_call.1} parent=0 // pred_check
    _
  $region19: #{tpu_custom_call.1} parent=0 // pred_check_branch
    %3290 = sbr.rel (0) target = $region21
  $region20: #{tpu_custom_call.1} parent=0 // pred_region
    _
  $region21: #{tpu_custom_call.1} parent=0 // pred_fallthru
    _
  // Predicated region
  $region22: #{tpu_custom_call.1} parent=0 // pred_check
    _
  $region23: #{tpu_custom_call.1} parent=0 // pred_check_branch
    %3292 = sbr.rel (0) target = $region25
  $region24: #{tpu_custom_call.1} parent=0 // pred_region
    _
  $region25: #{tpu_custom_call.1} parent=0 // pred_fallthru
    _

</llo_original>
